<compile_context>
chip_gen: v7x
topology: tpu7x:2x2x1
jax: 0.10.0
libtpu: 0.0.40
codegen_flags: <defaults>
</compile_context>

<pallas_src>
import functools
import math

import jax
import jax.numpy as jnp
from jax.experimental import pallas as pl
from jax.experimental.pallas import tpu as pltpu


def _multicell_lstm_kernel(xp_ref, m_ref, wh_ref,
                           h_out_ref, c_out_ref, a_out_ref,
                           h_st, c_st,
                           *, hidden, cell_num, t_chunk):
    """One grid step = one (direction, time-chunk).

    xp_ref : (t_chunk, B, P)  precomputed x @ Wx_fused + bias   (P = (3+K)*H)
    m_ref  : (t_chunk, B, 1)  1.0 = valid token, 0.0 = padding
    wh_ref : (H, P)           fused recurrent weight [Wh_gates | Wh_cells | Wh_attn]
    h/c/a_out_ref : (t_chunk, B, H / H / K)
    h_st, c_st    : (2, B, H) per-direction recurrent state, persists across chunks
    """
    H, K, TC = hidden, cell_num, t_chunk
    d = pl.program_id(0)        # 0 = left->right, 1 = right->left
    chunk = pl.program_id(1)    # chunk counter within the direction (grid order)

    @pl.when(chunk == 0)
    def _():
        z = jnp.zeros(h_st.shape[1:], h_st.dtype)
        h_st[d] = z
        c_st[d] = z

    wh = wh_ref[...]            # hoisted out of the time loop (single fused weight)

    def step(s, carry):
        h_prev, c_prev = carry
        # forward walks the chunk 0..TC-1, backward walks it TC-1..0
        tt = s + d * (TC - 1 - 2 * s)

        xp = xp_ref[tt]                         # (B, P)  input projection (precomputed)
        m = m_ref[tt]                           # (B, 1)

        # Single fused recurrent matmul per step.
        acts = xp + jnp.dot(h_prev, wh, preferred_element_type=jnp.float32)   # (B, P)

        i_g = jax.nn.sigmoid(acts[:, :H])               # shared input gate
        o_g = jax.nn.sigmoid(acts[:, H:2 * H])          # shared output gate
        f_g = 1.0 - i_g                                 # coupled forget gate
        cand = jnp.tanh(acts[:, 2 * H:(2 + K) * H])     # per-cell candidates (B, K*H)
        q = jnp.tanh(acts[:, (2 + K) * H:])             # attention query     (B, H)

        # score_k = <f*c_prev + i*cand_k, q> = base + <i*q, cand_k>
        fc = f_g * c_prev
        base = jnp.sum(fc * q, axis=-1, keepdims=True)                      # (B, 1)
        iq = i_g * q
        score_cols = [
            base + jnp.sum(iq * cand[:, k * H:(k + 1) * H], axis=-1, keepdims=True)
            for k in range(K)]
        scores = jnp.concatenate(score_cols, axis=-1)                       # (B, K)

        # Softmax over cells; reciprocal seeded on the EUP + one Newton step.
        scores = scores - jnp.max(scores, axis=-1, keepdims=True)
        e = jnp.exp(scores)
        denom = jnp.sum(e, axis=-1, keepdims=True)
        r = pl.reciprocal(denom, approx=True)
        r = r * (2.0 - denom * r)
        alpha = e * r                                                       # (B, K)

        # c_new = sum_k alpha_k (f*c_prev + i*cand_k) = f*c_prev + i * sum_k alpha_k cand_k
        cand_mix = alpha[:, 0:1] * cand[:, :H]
        for k in range(1, K):
            cand_mix = cand_mix + alpha[:, k:k + 1] * cand[:, k * H:(k + 1) * H]
        c_new = fc + i_g * cand_mix
        h_new = o_g * jnp.tanh(c_new)

        # Mask-gated carry: padded positions keep the previous state.
        h_new = m * h_new + (1.0 - m) * h_prev
        c_new = m * c_new + (1.0 - m) * c_prev

        h_out_ref[tt] = h_new
        c_out_ref[tt] = c_new
        a_out_ref[tt] = alpha
        return h_new, c_new

    h_last, c_last = jax.lax.fori_loop(0, TC, step, (h_st[d], c_st[d]), unroll=True)
    h_st[d] = h_last
    c_st[d] = c_last


def _fuse_direction_params(p):
    wxg, whg, bg, wxc, whc, bc, wxa, wha, ba = p
    wx = jnp.concatenate([wxg, wxc, wxa], axis=1)   # (D, P)
    wh = jnp.concatenate([whg, whc, wha], axis=1)   # (H, P)
    b = jnp.concatenate([bg, bc, ba], axis=1)       # (1, P)
    return wx, wh, b


def multicell_lstm_forward(x, mask, params_fwd, params_bwd, hidden, cell_num,
                           t_chunk=32):
    """x: (B, T, D) f32, mask: (B, T) f32.  Returns (h, c, a), each (B, T, 2*.)."""
    B, T, D = x.shape
    H, K = hidden, cell_num
    P = (3 + K) * H

    # Fuse per-direction weights and stack the two directions.
    wx_f, wh_f, b_f = _fuse_direction_params(params_fwd)
    wx_b, wh_b, b_b = _fuse_direction_params(params_bwd)
    wx = jnp.stack([wx_f, wx_b])            # (2, D, P)
    wh = jnp.stack([wh_f, wh_b])            # (2, H, P)
    b = jnp.stack([b_f, b_b])               # (2, 1, P)

    # Pad batch to a sublane multiple and time to a chunk multiple; padded
    # rows / steps carry mask = 0 so the recurrent state is untouched.
    tc = min(t_chunk, T)
    T_pad = pl.cdiv(T, tc) * tc
    B_pad = pl.cdiv(B, 8) * 8
    x_p = jnp.zeros((B_pad, T_pad, D), jnp.float32).at[:B, :T].set(x.astype(jnp.float32))
    m_p = jnp.zeros((B_pad, T_pad), jnp.float32).at[:B, :T].set(mask.astype(jnp.float32))

    # Hoist ALL input projections out of the recurrence: one big sequence-level
    # matmul per direction; the time-major layout is produced directly by the
    # matmul output instead of a separate HBM transpose of x.
    xproj = jnp.einsum('btd,zdp->ztbp', x_p, wx,
                       precision=jax.lax.Precision.HIGHEST) + b[:, None, :, :]
    m_t = jnp.transpose(m_p, (1, 0))[:, :, None]            # (T_pad, B_pad, 1)

    n_chunks = T_pad // tc

    def chunk_idx(dd, t):
        # forward direction walks chunks 0..n-1, backward walks them n-1..0
        return t + dd * (n_chunks - 1 - 2 * t)

    kernel = functools.partial(_multicell_lstm_kernel,
                               hidden=H, cell_num=K, t_chunk=tc)

    h_all, c_all, a_all = pl.pallas_call(
        kernel,
        grid=(2, n_chunks),
        in_specs=[
            pl.BlockSpec((None, tc, B_pad, P),
                         lambda d, t: (d, chunk_idx(d, t), 0, 0)),
            pl.BlockSpec((tc, B_pad, 1),
                         lambda d, t: (chunk_idx(d, t), 0, 0)),
            pl.BlockSpec((None, H, P), lambda d, t: (d, 0, 0)),
        ],
        out_specs=[
            pl.BlockSpec((None, tc, B_pad, H),
                         lambda d, t: (d, chunk_idx(d, t), 0, 0)),
            pl.BlockSpec((None, tc, B_pad, H),
                         lambda d, t: (d, chunk_idx(d, t), 0, 0)),
            pl.BlockSpec((None, tc, B_pad, K),
                         lambda d, t: (d, chunk_idx(d, t), 0, 0)),
        ],
        out_shape=(
            jax.ShapeDtypeStruct((2, T_pad, B_pad, H), jnp.float32),
            jax.ShapeDtypeStruct((2, T_pad, B_pad, H), jnp.float32),
            jax.ShapeDtypeStruct((2, T_pad, B_pad, K), jnp.float32),
        ),
        scratch_shapes=[pltpu.VMEM((2, B_pad, H), jnp.float32),
                        pltpu.VMEM((2, B_pad, H), jnp.float32)],
        compiler_params=pltpu.CompilerParams(
            dimension_semantics=("parallel", "arbitrary")),  # dirs parallel, time serial
    )(xproj, m_t, wh)

    def to_bt2(z, width):
        z = z[:, :T, :B]                                    # drop padding: (2, T, B, w)
        # (2,T,B,w) -> (B,T,2,w) -> (B,T,2w) == concat([fwd, bwd], -1)
        return jnp.transpose(z, (2, 1, 0, 3)).reshape(B, T, 2 * width)

    return to_bt2(h_all, H), to_bt2(c_all, H), to_bt2(a_all, K)


def init_direction_params(key, input_dim, hidden, cell_num):
    """Deterministic uniform(-1/sqrt(H), 1/sqrt(H)) init, like torch LSTM init."""
    stdv = 1.0 / math.sqrt(hidden)
    shapes = [
        (input_dim, 2 * hidden), (hidden, 2 * hidden), (1, 2 * hidden),                        # gates
        (input_dim, cell_num * hidden), (hidden, cell_num * hidden), (1, cell_num * hidden),   # cells
        (input_dim, hidden), (hidden, hidden), (1, hidden),                                    # attention
    ]
    keys = jax.random.split(key, len(shapes))
    return tuple(jax.random.uniform(k, s, jnp.float32, -stdv, stdv)
                 for k, s in zip(keys, shapes))


# ---------- pure-JAX reference (lax.scan) for correctness checking ----------
def _reference_direction(x, mask, p, hidden, cell_num, reverse):
    wxg, whg, bg, wxc, whc, bc, wxa, wha, ba = p
    B, T, D = x.shape
    xs = jnp.transpose(x, (1, 0, 2))
    ms = jnp.transpose(mask, (1, 0))[:, :, None].astype(jnp.float32)
    if reverse:
        xs, ms = xs[::-1], ms[::-1]
    h0 = jnp.zeros((B, hidden), jnp.float32)
    c0 = jnp.zeros((B, hidden), jnp.float32)

    def step(carry, inp):
        h_prev, c_prev = carry
        xt, mt = inp
        gates = xt @ wxg + h_prev @ whg + bg
        i_g = jax.nn.sigmoid(gates[:, :hidden])
        o_g = jax.nn.sigmoid(gates[:, hidden:])
        cand = jnp.tanh(xt @ wxc + h_prev @ whc + bc).reshape(B, cell_num, hidden)
        q = jnp.tanh(xt @ wxa + h_prev @ wha + ba)
        c_k = (1.0 - i_g)[:, None, :] * c_prev[:, None, :] + i_g[:, None, :] * cand
        scores = jnp.sum(c_k * q[:, None, :], axis=-1)
        alpha = jax.nn.softmax(scores, axis=-1)
        c_new = jnp.sum(alpha[:, :, None] * c_k, axis=1)
        h_new = o_g * jnp.tanh(c_new)
        h_new = mt * h_new + (1.0 - mt) * h_prev
        c_new = mt * c_new + (1.0 - mt) * c_prev
        return (h_new, c_new), (h_new, c_new, alpha)

    _, (hs, cs, als) = jax.lax.scan(step, (h0, c0), (xs, ms))
    if reverse:
        hs, cs, als = hs[::-1], cs[::-1], als[::-1]
    tb = lambda z: jnp.transpose(z, (1, 0, 2))
    return tb(hs), tb(cs), tb(als)


if __name__ == "__main__":
    B, T, D = 2, 8, 16
    HIDDEN_DIM, CELL_NUM = 32, 4
    H = HIDDEN_DIM // 2          # bidirectional -> per-direction hidden

    key = jax.random.PRNGKey(0)
    kx, kf, kb = jax.random.split(key, 3)
    x = jax.random.normal(kx, (B, T, D), jnp.float32)
    mask = jnp.ones((B, T), jnp.float32).at[1, 6:].set(0.0)   # second sequence padded

    params_fwd = init_direction_params(kf, D, H, CELL_NUM)
    params_bwd = init_direction_params(kb, D, H, CELL_NUM)

    # t_chunk=4 -> 2 time-chunks per direction: exercises the cross-chunk state
    # carry and the reversed chunk walk of the backward direction.
    h, c, a = multicell_lstm_forward(x, mask, params_fwd, params_bwd, H, CELL_NUM,
                                     t_chunk=4)
    jax.block_until_ready((h, c, a))

    assert h.shape == (B, T, HIDDEN_DIM) and c.shape == (B, T, HIDDEN_DIM)
    assert a.shape == (B, T, 2 * CELL_NUM)

    # Check against the pure-JAX reference.
    hf, cf, af = _reference_direction(x, mask, params_fwd, H, CELL_NUM, reverse=False)
    hb, cb, ab = _reference_direction(x, mask, params_bwd, H, CELL_NUM, reverse=True)
    h_ref = jnp.concatenate([hf, hb], axis=-1)
    c_ref = jnp.concatenate([cf, cb], axis=-1)
    a_ref = jnp.concatenate([af, ab], axis=-1)

    assert jnp.allclose(h, h_ref, atol=1e-4, rtol=1e-4), "h mismatch"
    assert jnp.allclose(c, c_ref, atol=1e-4, rtol=1e-4), "c mismatch"
    assert jnp.allclose(a, a_ref, atol=1e-4, rtol=1e-4), "a mismatch"

    print("KERNEL_OK")
</pallas_src>

<mosaic_0001>
module attributes {stable_mosaic.version = 11 : i64} {
  func.func @_multicell_lstm_kernel(%arg0: i32, %arg1: i32, %arg2: memref<1x4x8x112xf32, #tpu.memory_space<vmem>>, %arg3: memref<4x8x1xf32, #tpu.memory_space<vmem>>, %arg4: memref<1x16x112xf32, #tpu.memory_space<vmem>>, %arg5: memref<1x4x8x16xf32, #tpu.memory_space<vmem>>, %arg6: memref<1x4x8x16xf32, #tpu.memory_space<vmem>>, %arg7: memref<1x4x8x4xf32, #tpu.memory_space<vmem>>, %arg8: memref<2x8x16xf32, #tpu.memory_space<vmem>>, %arg9: memref<2x8x16xf32, #tpu.memory_space<vmem>>) attributes {dimension_semantics = [#tpu.dimension_semantics<parallel>, #tpu.dimension_semantics<arbitrary>], iteration_bounds = array<i64: 2, 2>, scalar_prefetch = 0 : i64, scratch_operands = 2 : i64, tpu.core_type = #tpu.core_type<tc>, window_params = [{transform_indices = @transform_0, window_bounds = array<i64: 1, 4, 8, 112>}, {transform_indices = @transform_1, window_bounds = array<i64: 4, 8, 1>}, {transform_indices = @transform_2, window_bounds = array<i64: 1, 16, 112>}, {transform_indices = @transform_3, window_bounds = array<i64: 1, 4, 8, 16>}, {transform_indices = @transform_4, window_bounds = array<i64: 1, 4, 8, 16>}, {transform_indices = @transform_5, window_bounds = array<i64: 1, 4, 8, 4>}]} {
    %c0_i32 = arith.constant 0 : i32
    %0 = arith.cmpi eq, %arg1, %c0_i32 : i32
    %1 = arith.extui %0 : i1 to i32
    %c0_i32_0 = arith.constant 0 : i32
    %2 = arith.cmpi ne, %1, %c0_i32_0 : i32
    scf.if %2 {
      %cst_131 = arith.constant 0.000000e+00 : f32
      %495 = vector.broadcast %cst_131 : f32 to vector<8x16xf32>
      %496 = arith.index_cast %arg0 : i32 to index
      %c0_132 = arith.constant 0 : index
      %c0_133 = arith.constant 0 : index
      %497 = vector.load %arg8[%496, %c0_132, %c0_133] : memref<2x8x16xf32, #tpu.memory_space<vmem>>, vector<1x8x16xf32>
      %498 = vector.shape_cast %497 : vector<1x8x16xf32> to vector<8x16xf32>
      %499 = vector.shape_cast %495 : vector<8x16xf32> to vector<1x8x16xf32>
      tpu.vector_store %arg8[%496, %c0_132, %c0_133], %499 {strides = array<i32>} : memref<2x8x16xf32, #tpu.memory_space<vmem>>, vector<1x8x16xf32>,
      %500 = arith.index_cast %arg0 : i32 to index
      %c0_134 = arith.constant 0 : index
      %c0_135 = arith.constant 0 : index
      %501 = vector.load %arg9[%500, %c0_134, %c0_135] : memref<2x8x16xf32, #tpu.memory_space<vmem>>, vector<1x8x16xf32>
      %502 = vector.shape_cast %501 : vector<1x8x16xf32> to vector<8x16xf32>
      %503 = vector.shape_cast %495 : vector<8x16xf32> to vector<1x8x16xf32>
      tpu.vector_store %arg9[%500, %c0_134, %c0_135], %503 {strides = array<i32>} : memref<2x8x16xf32, #tpu.memory_space<vmem>>, vector<1x8x16xf32>,
    } else {
    }
    %c0 = arith.constant 0 : index
    %c0_1 = arith.constant 0 : index
    %c0_2 = arith.constant 0 : index
    %3 = vector.load %arg4[%c0, %c0_1, %c0_2] : memref<1x16x112xf32, #tpu.memory_space<vmem>>, vector<1x16x112xf32>
    %4 = vector.shape_cast %3 : vector<1x16x112xf32> to vector<16x112xf32>
    %5 = arith.index_cast %arg0 : i32 to index
    %c0_3 = arith.constant 0 : index
    %c0_4 = arith.constant 0 : index
    %6 = vector.load %arg8[%5, %c0_3, %c0_4] : memref<2x8x16xf32, #tpu.memory_space<vmem>>, vector<1x8x16xf32>
    %7 = vector.shape_cast %6 : vector<1x8x16xf32> to vector<8x16xf32>
    %8 = arith.index_cast %arg0 : i32 to index
    %c0_5 = arith.constant 0 : index
    %c0_6 = arith.constant 0 : index
    %9 = vector.load %arg9[%8, %c0_5, %c0_6] : memref<2x8x16xf32, #tpu.memory_space<vmem>>, vector<1x8x16xf32>
    %10 = vector.shape_cast %9 : vector<1x8x16xf32> to vector<8x16xf32>
    %c0_i32_7 = arith.constant 0 : i32
    %c2_i32 = arith.constant 2 : i32
    %11 = arith.muli %c2_i32, %c0_i32_7 : i32
    %c3_i32 = arith.constant 3 : i32
    %12 = arith.subi %c3_i32, %11 : i32
    %13 = arith.muli %arg0, %12 : i32
    %14 = arith.addi %c0_i32_7, %13 : i32
    %c0_8 = arith.constant 0 : index
    %15 = arith.index_cast %14 : i32 to index
    %c0_9 = arith.constant 0 : index
    %c0_10 = arith.constant 0 : index
    %16 = vector.load %arg2[%c0_8, %15, %c0_9, %c0_10] : memref<1x4x8x112xf32, #tpu.memory_space<vmem>>, vector<1x1x8x112xf32>
    %17 = vector.shape_cast %16 : vector<1x1x8x112xf32> to vector<8x112xf32>
    %18 = arith.index_cast %14 : i32 to index
    %c0_11 = arith.constant 0 : index
    %c0_12 = arith.constant 0 : index
    %19 = vector.load %arg3[%18, %c0_11, %c0_12] : memref<4x8x1xf32, #tpu.memory_space<vmem>>, vector<1x8x1xf32>
    %20 = vector.shape_cast %19 : vector<1x8x1xf32> to vector<8x1xf32>
    %cst = arith.constant dense<0.000000e+00> : vector<8x112xf32>
    %21 = tpu.matmul %7, %4, %cst {dimension_numbers = #tpu.dot_dimension_numbers<[1], [0], [0], [1], [0, 0, 1, 1], [], []>} : vector<8x16xf32>, vector<16x112xf32>, vector<8x112xf32> -> vector<8x112xf32>
    %22 = arith.addf %17, %21 : vector<8x112xf32>
    %23 = vector.extract_strided_slice %22 {offsets = [0, 0], sizes = [8, 16], strides = [1, 1]} : vector<8x112xf32> to vector<8x16xf32>
    %24 = arith.negf %23 : vector<8x16xf32>
    %25 = math.exp %24 : vector<8x16xf32>
    %cst_13 = arith.constant 1.000000e+00 : f32
    %26 = vector.broadcast %cst_13 : f32 to vector<8x16xf32>
    %27 = arith.addf %26, %25 : vector<8x16xf32>
    %28 = arith.divf %26, %27 : vector<8x16xf32>
    %29 = vector.extract_strided_slice %22 {offsets = [0, 16], sizes = [8, 16], strides = [1, 1]} : vector<8x112xf32> to vector<8x16xf32>
    %30 = arith.negf %29 : vector<8x16xf32>
    %31 = math.exp %30 : vector<8x16xf32>
    %cst_14 = arith.constant 1.000000e+00 : f32
    %32 = vector.broadcast %cst_14 : f32 to vector<8x16xf32>
    %33 = arith.addf %32, %31 : vector<8x16xf32>
    %34 = arith.divf %32, %33 : vector<8x16xf32>
    %cst_15 = arith.constant 1.000000e+00 : f32
    %35 = vector.broadcast %cst_15 : f32 to vector<8x16xf32>
    %36 = arith.subf %35, %28 : vector<8x16xf32>
    %37 = vector.extract_strided_slice %22 {offsets = [0, 32], sizes = [8, 64], strides = [1, 1]} : vector<8x112xf32> to vector<8x64xf32>
    %38 = math.tanh %37 : vector<8x64xf32>
    %39 = vector.extract_strided_slice %22 {offsets = [0, 96], sizes = [8, 16], strides = [1, 1]} : vector<8x112xf32> to vector<8x16xf32>
    %40 = math.tanh %39 : vector<8x16xf32>
    %41 = arith.mulf %36, %10 : vector<8x16xf32>
    %42 = arith.mulf %41, %40 : vector<8x16xf32>
    %cst_16 = arith.constant dense<0.000000e+00> : vector<8xf32>
    %43 = vector.multi_reduction <add>, %42, %cst_16 [1] : vector<8x16xf32> to vector<8xf32>
    %44 = vector.shape_cast %43 : vector<8xf32> to vector<8x1xf32>
    %45 = arith.mulf %28, %40 : vector<8x16xf32>
    %46 = vector.extract_strided_slice %38 {offsets = [0, 0], sizes = [8, 16], strides = [1, 1]} : vector<8x64xf32> to vector<8x16xf32>
    %47 = arith.mulf %45, %46 : vector<8x16xf32>
    %cst_17 = arith.constant dense<0.000000e+00> : vector<8xf32>
    %48 = vector.multi_reduction <add>, %47, %cst_17 [1] : vector<8x16xf32> to vector<8xf32>
    %49 = vector.shape_cast %48 : vector<8xf32> to vector<8x1xf32>
    %50 = arith.addf %44, %49 : vector<8x1xf32>
    %51 = vector.extract_strided_slice %38 {offsets = [0, 16], sizes = [8, 16], strides = [1, 1]} : vector<8x64xf32> to vector<8x16xf32>
    %52 = arith.mulf %45, %51 : vector<8x16xf32>
    %cst_18 = arith.constant dense<0.000000e+00> : vector<8xf32>
    %53 = vector.multi_reduction <add>, %52, %cst_18 [1] : vector<8x16xf32> to vector<8xf32>
    %54 = vector.shape_cast %53 : vector<8xf32> to vector<8x1xf32>
    %55 = arith.addf %44, %54 : vector<8x1xf32>
    %56 = vector.extract_strided_slice %38 {offsets = [0, 32], sizes = [8, 16], strides = [1, 1]} : vector<8x64xf32> to vector<8x16xf32>
    %57 = arith.mulf %45, %56 : vector<8x16xf32>
    %cst_19 = arith.constant dense<0.000000e+00> : vector<8xf32>
    %58 = vector.multi_reduction <add>, %57, %cst_19 [1] : vector<8x16xf32> to vector<8xf32>
    %59 = vector.shape_cast %58 : vector<8xf32> to vector<8x1xf32>
    %60 = arith.addf %44, %59 : vector<8x1xf32>
    %61 = vector.extract_strided_slice %38 {offsets = [0, 48], sizes = [8, 16], strides = [1, 1]} : vector<8x64xf32> to vector<8x16xf32>
    %62 = arith.mulf %45, %61 : vector<8x16xf32>
    %cst_20 = arith.constant dense<0.000000e+00> : vector<8xf32>
    %63 = vector.multi_reduction <add>, %62, %cst_20 [1] : vector<8x16xf32> to vector<8xf32>
    %64 = vector.shape_cast %63 : vector<8xf32> to vector<8x1xf32>
    %65 = arith.addf %44, %64 : vector<8x1xf32>
    %66 = tpu.concatenate %50, %55, %60, %65 in 1 : vector<8x1xf32>, vector<8x1xf32>, vector<8x1xf32>, vector<8x1xf32> -> vector<8x4xf32>
    %cst_21 = arith.constant dense<0xFF800000> : vector<8xf32>
    %67 = vector.multi_reduction <maximumf>, %66, %cst_21 [1] : vector<8x4xf32> to vector<8xf32>
    %68 = vector.shape_cast %67 : vector<8xf32> to vector<8x1xf32>
    %69 = vector.broadcast %68 : vector<8x1xf32> to vector<8x4xf32>
    %70 = arith.subf %66, %69 : vector<8x4xf32>
    %71 = math.exp %70 : vector<8x4xf32>
    %cst_22 = arith.constant dense<0.000000e+00> : vector<8xf32>
    %72 = vector.multi_reduction <add>, %71, %cst_22 [1] : vector<8x4xf32> to vector<8xf32>
    %73 = vector.shape_cast %72 : vector<8xf32> to vector<8x1xf32>
    %74 = tpu.reciprocal %73 {approx = true} : vector<8x1xf32> -> vector<8x1xf32>
    %75 = arith.mulf %73, %74 : vector<8x1xf32>
    %cst_23 = arith.constant 2.000000e+00 : f32
    %76 = vector.broadcast %cst_23 : f32 to vector<8x1xf32>
    %77 = arith.subf %76, %75 : vector<8x1xf32>
    %78 = arith.mulf %74, %77 : vector<8x1xf32>
    %79 = vector.broadcast %78 : vector<8x1xf32> to vector<8x4xf32>
    %80 = arith.mulf %71, %79 : vector<8x4xf32>
    %81 = vector.extract_strided_slice %80 {offsets = [0, 0], sizes = [8, 1], strides = [1, 1]} : vector<8x4xf32> to vector<8x1xf32>
    %82 = vector.extract_strided_slice %38 {offsets = [0, 0], sizes = [8, 16], strides = [1, 1]} : vector<8x64xf32> to vector<8x16xf32>
    %83 = vector.broadcast %81 : vector<8x1xf32> to vector<8x16xf32>
    %84 = arith.mulf %83, %82 : vector<8x16xf32>
    %85 = vector.extract_strided_slice %80 {offsets = [0, 1], sizes = [8, 1], strides = [1, 1]} : vector<8x4xf32> to vector<8x1xf32>
    %86 = vector.extract_strided_slice %38 {offsets = [0, 16], sizes = [8, 16], strides = [1, 1]} : vector<8x64xf32> to vector<8x16xf32>
    %87 = vector.broadcast %85 : vector<8x1xf32> to vector<8x16xf32>
    %88 = arith.mulf %87, %86 : vector<8x16xf32>
    %89 = arith.addf %84, %88 : vector<8x16xf32>
    %90 = vector.extract_strided_slice %80 {offsets = [0, 2], sizes = [8, 1], strides = [1, 1]} : vector<8x4xf32> to vector<8x1xf32>
    %91 = vector.extract_strided_slice %38 {offsets = [0, 32], sizes = [8, 16], strides = [1, 1]} : vector<8x64xf32> to vector<8x16xf32>
    %92 = vector.broadcast %90 : vector<8x1xf32> to vector<8x16xf32>
    %93 = arith.mulf %92, %91 : vector<8x16xf32>
    %94 = arith.addf %89, %93 : vector<8x16xf32>
    %95 = vector.extract_strided_slice %80 {offsets = [0, 3], sizes = [8, 1], strides = [1, 1]} : vector<8x4xf32> to vector<8x1xf32>
    %96 = vector.extract_strided_slice %38 {offsets = [0, 48], sizes = [8, 16], strides = [1, 1]} : vector<8x64xf32> to vector<8x16xf32>
    %97 = vector.broadcast %95 : vector<8x1xf32> to vector<8x16xf32>
    %98 = arith.mulf %97, %96 : vector<8x16xf32>
    %99 = arith.addf %94, %98 : vector<8x16xf32>
    %100 = arith.mulf %28, %99 : vector<8x16xf32>
    %101 = arith.addf %41, %100 : vector<8x16xf32>
    %102 = math.tanh %101 : vector<8x16xf32>
    %103 = arith.mulf %34, %102 : vector<8x16xf32>
    %104 = vector.broadcast %20 : vector<8x1xf32> to vector<8x16xf32>
    %105 = arith.mulf %104, %103 : vector<8x16xf32>
    %cst_24 = arith.constant 1.000000e+00 : f32
    %106 = vector.broadcast %cst_24 : f32 to vector<8x1xf32>
    %107 = arith.subf %106, %20 : vector<8x1xf32>
    %108 = vector.broadcast %107 : vector<8x1xf32> to vector<8x16xf32>
    %109 = arith.mulf %108, %7 : vector<8x16xf32>
    %110 = arith.addf %105, %109 : vector<8x16xf32>
    %111 = vector.broadcast %20 : vector<8x1xf32> to vector<8x16xf32>
    %112 = arith.mulf %111, %101 : vector<8x16xf32>
    %cst_25 = arith.constant 1.000000e+00 : f32
    %113 = vector.broadcast %cst_25 : f32 to vector<8x1xf32>
    %114 = arith.subf %113, %20 : vector<8x1xf32>
    %115 = vector.broadcast %114 : vector<8x1xf32> to vector<8x16xf32>
    %116 = arith.mulf %115, %10 : vector<8x16xf32>
    %117 = arith.addf %112, %116 : vector<8x16xf32>
    %c0_26 = arith.constant 0 : index
    %118 = arith.index_cast %14 : i32 to index
    %c0_27 = arith.constant 0 : index
    %c0_28 = arith.constant 0 : index
    %119 = vector.load %arg5[%c0_26, %118, %c0_27, %c0_28] : memref<1x4x8x16xf32, #tpu.memory_space<vmem>>, vector<1x1x8x16xf32>
    %120 = vector.shape_cast %119 : vector<1x1x8x16xf32> to vector<8x16xf32>
    %121 = vector.shape_cast %110 : vector<8x16xf32> to vector<1x1x8x16xf32>
    tpu.vector_store %arg5[%c0_26, %118, %c0_27, %c0_28], %121 {strides = array<i32>} : memref<1x4x8x16xf32, #tpu.memory_space<vmem>>, vector<1x1x8x16xf32>,
    %c0_29 = arith.constant 0 : index
    %122 = arith.index_cast %14 : i32 to index
    %c0_30 = arith.constant 0 : index
    %c0_31 = arith.constant 0 : index
    %123 = vector.load %arg6[%c0_29, %122, %c0_30, %c0_31] : memref<1x4x8x16xf32, #tpu.memory_space<vmem>>, vector<1x1x8x16xf32>
    %124 = vector.shape_cast %123 : vector<1x1x8x16xf32> to vector<8x16xf32>
    %125 = vector.shape_cast %117 : vector<8x16xf32> to vector<1x1x8x16xf32>
    tpu.vector_store %arg6[%c0_29, %122, %c0_30, %c0_31], %125 {strides = array<i32>} : memref<1x4x8x16xf32, #tpu.memory_space<vmem>>, vector<1x1x8x16xf32>,
    %c0_32 = arith.constant 0 : index
    %126 = arith.index_cast %14 : i32 to index
    %c0_33 = arith.constant 0 : index
    %c0_34 = arith.constant 0 : index
    %127 = vector.load %arg7[%c0_32, %126, %c0_33, %c0_34] : memref<1x4x8x4xf32, #tpu.memory_space<vmem>>, vector<1x1x8x4xf32>
    %128 = vector.shape_cast %127 : vector<1x1x8x4xf32> to vector<8x4xf32>
    %129 = vector.shape_cast %80 : vector<8x4xf32> to vector<1x1x8x4xf32>
    tpu.vector_store %arg7[%c0_32, %126, %c0_33, %c0_34], %129 {strides = array<i32>} : memref<1x4x8x4xf32, #tpu.memory_space<vmem>>, vector<1x1x8x4xf32>,
    %c1_i32 = arith.constant 1 : i32
    %c2_i32_35 = arith.constant 2 : i32
    %130 = arith.muli %c2_i32_35, %c1_i32 : i32
    %c3_i32_36 = arith.constant 3 : i32
    %131 = arith.subi %c3_i32_36, %130 : i32
    %132 = arith.muli %arg0, %131 : i32
    %133 = arith.addi %c1_i32, %132 : i32
    %c0_37 = arith.constant 0 : index
    %134 = arith.index_cast %133 : i32 to index
    %c0_38 = arith.constant 0 : index
    %c0_39 = arith.constant 0 : index
    %135 = vector.load %arg2[%c0_37, %134, %c0_38, %c0_39] : memref<1x4x8x112xf32, #tpu.memory_space<vmem>>, vector<1x1x8x112xf32>
    %136 = vector.shape_cast %135 : vector<1x1x8x112xf32> to vector<8x112xf32>
    %137 = arith.index_cast %133 : i32 to index
    %c0_40 = arith.constant 0 : index
    %c0_41 = arith.constant 0 : index
    %138 = vector.load %arg3[%137, %c0_40, %c0_41] : memref<4x8x1xf32, #tpu.memory_space<vmem>>, vector<1x8x1xf32>
    %139 = vector.shape_cast %138 : vector<1x8x1xf32> to vector<8x1xf32>
    %cst_42 = arith.constant dense<0.000000e+00> : vector<8x112xf32>
    %140 = tpu.matmul %110, %4, %cst_42 {dimension_numbers = #tpu.dot_dimension_numbers<[1], [0], [0], [1], [0, 0, 1, 1], [], []>} : vector<8x16xf32>, vector<16x112xf32>, vector<8x112xf32> -> vector<8x112xf32>
    %141 = arith.addf %136, %140 : vector<8x112xf32>
    %142 = vector.extract_strided_slice %141 {offsets = [0, 0], sizes = [8, 16], strides = [1, 1]} : vector<8x112xf32> to vector<8x16xf32>
    %143 = arith.negf %142 : vector<8x16xf32>
    %144 = math.exp %143 : vector<8x16xf32>
    %cst_43 = arith.constant 1.000000e+00 : f32
    %145 = vector.broadcast %cst_43 : f32 to vector<8x16xf32>
    %146 = arith.addf %145, %144 : vector<8x16xf32>
    %147 = arith.divf %145, %146 : vector<8x16xf32>
    %148 = vector.extract_strided_slice %141 {offsets = [0, 16], sizes = [8, 16], strides = [1, 1]} : vector<8x112xf32> to vector<8x16xf32>
    %149 = arith.negf %148 : vector<8x16xf32>
    %150 = math.exp %149 : vector<8x16xf32>
    %cst_44 = arith.constant 1.000000e+00 : f32
    %151 = vector.broadcast %cst_44 : f32 to vector<8x16xf32>
    %152 = arith.addf %151, %150 : vector<8x16xf32>
    %153 = arith.divf %151, %152 : vector<8x16xf32>
    %cst_45 = arith.constant 1.000000e+00 : f32
    %154 = vector.broadcast %cst_45 : f32 to vector<8x16xf32>
    %155 = arith.subf %154, %147 : vector<8x16xf32>
    %156 = vector.extract_strided_slice %141 {offsets = [0, 32], sizes = [8, 64], strides = [1, 1]} : vector<8x112xf32> to vector<8x64xf32>
    %157 = math.tanh %156 : vector<8x64xf32>
    %158 = vector.extract_strided_slice %141 {offsets = [0, 96], sizes = [8, 16], strides = [1, 1]} : vector<8x112xf32> to vector<8x16xf32>
    %159 = math.tanh %158 : vector<8x16xf32>
    %160 = arith.mulf %155, %117 : vector<8x16xf32>
    %161 = arith.mulf %160, %159 : vector<8x16xf32>
    %cst_46 = arith.constant dense<0.000000e+00> : vector<8xf32>
    %162 = vector.multi_reduction <add>, %161, %cst_46 [1] : vector<8x16xf32> to vector<8xf32>
    %163 = vector.shape_cast %162 : vector<8xf32> to vector<8x1xf32>
    %164 = arith.mulf %147, %159 : vector<8x16xf32>
    %165 = vector.extract_strided_slice %157 {offsets = [0, 0], sizes = [8, 16], strides = [1, 1]} : vector<8x64xf32> to vector<8x16xf32>
    %166 = arith.mulf %164, %165 : vector<8x16xf32>
    %cst_47 = arith.constant dense<0.000000e+00> : vector<8xf32>
    %167 = vector.multi_reduction <add>, %166, %cst_47 [1] : vector<8x16xf32> to vector<8xf32>
    %168 = vector.shape_cast %167 : vector<8xf32> to vector<8x1xf32>
    %169 = arith.addf %163, %168 : vector<8x1xf32>
    %170 = vector.extract_strided_slice %157 {offsets = [0, 16], sizes = [8, 16], strides = [1, 1]} : vector<8x64xf32> to vector<8x16xf32>
    %171 = arith.mulf %164, %170 : vector<8x16xf32>
    %cst_48 = arith.constant dense<0.000000e+00> : vector<8xf32>
    %172 = vector.multi_reduction <add>, %171, %cst_48 [1] : vector<8x16xf32> to vector<8xf32>
    %173 = vector.shape_cast %172 : vector<8xf32> to vector<8x1xf32>
    %174 = arith.addf %163, %173 : vector<8x1xf32>
    %175 = vector.extract_strided_slice %157 {offsets = [0, 32], sizes = [8, 16], strides = [1, 1]} : vector<8x64xf32> to vector<8x16xf32>
    %176 = arith.mulf %164, %175 : vector<8x16xf32>
    %cst_49 = arith.constant dense<0.000000e+00> : vector<8xf32>
    %177 = vector.multi_reduction <add>, %176, %cst_49 [1] : vector<8x16xf32> to vector<8xf32>
    %178 = vector.shape_cast %177 : vector<8xf32> to vector<8x1xf32>
    %179 = arith.addf %163, %178 : vector<8x1xf32>
    %180 = vector.extract_strided_slice %157 {offsets = [0, 48], sizes = [8, 16], strides = [1, 1]} : vector<8x64xf32> to vector<8x16xf32>
    %181 = arith.mulf %164, %180 : vector<8x16xf32>
    %cst_50 = arith.constant dense<0.000000e+00> : vector<8xf32>
    %182 = vector.multi_reduction <add>, %181, %cst_50 [1] : vector<8x16xf32> to vector<8xf32>
    %183 = vector.shape_cast %182 : vector<8xf32> to vector<8x1xf32>
    %184 = arith.addf %163, %183 : vector<8x1xf32>
    %185 = tpu.concatenate %169, %174, %179, %184 in 1 : vector<8x1xf32>, vector<8x1xf32>, vector<8x1xf32>, vector<8x1xf32> -> vector<8x4xf32>
    %cst_51 = arith.constant dense<0xFF800000> : vector<8xf32>
    %186 = vector.multi_reduction <maximumf>, %185, %cst_51 [1] : vector<8x4xf32> to vector<8xf32>
    %187 = vector.shape_cast %186 : vector<8xf32> to vector<8x1xf32>
    %188 = vector.broadcast %187 : vector<8x1xf32> to vector<8x4xf32>
    %189 = arith.subf %185, %188 : vector<8x4xf32>
    %190 = math.exp %189 : vector<8x4xf32>
    %cst_52 = arith.constant dense<0.000000e+00> : vector<8xf32>
    %191 = vector.multi_reduction <add>, %190, %cst_52 [1] : vector<8x4xf32> to vector<8xf32>
    %192 = vector.shape_cast %191 : vector<8xf32> to vector<8x1xf32>
    %193 = tpu.reciprocal %192 {approx = true} : vector<8x1xf32> -> vector<8x1xf32>
    %194 = arith.mulf %192, %193 : vector<8x1xf32>
    %cst_53 = arith.constant 2.000000e+00 : f32
    %195 = vector.broadcast %cst_53 : f32 to vector<8x1xf32>
    %196 = arith.subf %195, %194 : vector<8x1xf32>
    %197 = arith.mulf %193, %196 : vector<8x1xf32>
    %198 = vector.broadcast %197 : vector<8x1xf32> to vector<8x4xf32>
    %199 = arith.mulf %190, %198 : vector<8x4xf32>
    %200 = vector.extract_strided_slice %199 {offsets = [0, 0], sizes = [8, 1], strides = [1, 1]} : vector<8x4xf32> to vector<8x1xf32>
    %201 = vector.extract_strided_slice %157 {offsets = [0, 0], sizes = [8, 16], strides = [1, 1]} : vector<8x64xf32> to vector<8x16xf32>
    %202 = vector.broadcast %200 : vector<8x1xf32> to vector<8x16xf32>
    %203 = arith.mulf %202, %201 : vector<8x16xf32>
    %204 = vector.extract_strided_slice %199 {offsets = [0, 1], sizes = [8, 1], strides = [1, 1]} : vector<8x4xf32> to vector<8x1xf32>
    %205 = vector.extract_strided_slice %157 {offsets = [0, 16], sizes = [8, 16], strides = [1, 1]} : vector<8x64xf32> to vector<8x16xf32>
    %206 = vector.broadcast %204 : vector<8x1xf32> to vector<8x16xf32>
    %207 = arith.mulf %206, %205 : vector<8x16xf32>
    %208 = arith.addf %203, %207 : vector<8x16xf32>
    %209 = vector.extract_strided_slice %199 {offsets = [0, 2], sizes = [8, 1], strides = [1, 1]} : vector<8x4xf32> to vector<8x1xf32>
    %210 = vector.extract_strided_slice %157 {offsets = [0, 32], sizes = [8, 16], strides = [1, 1]} : vector<8x64xf32> to vector<8x16xf32>
    %211 = vector.broadcast %209 : vector<8x1xf32> to vector<8x16xf32>
    %212 = arith.mulf %211, %210 : vector<8x16xf32>
    %213 = arith.addf %208, %212 : vector<8x16xf32>
    %214 = vector.extract_strided_slice %199 {offsets = [0, 3], sizes = [8, 1], strides = [1, 1]} : vector<8x4xf32> to vector<8x1xf32>
    %215 = vector.extract_strided_slice %157 {offsets = [0, 48], sizes = [8, 16], strides = [1, 1]} : vector<8x64xf32> to vector<8x16xf32>
    %216 = vector.broadcast %214 : vector<8x1xf32> to vector<8x16xf32>
    %217 = arith.mulf %216, %215 : vector<8x16xf32>
    %218 = arith.addf %213, %217 : vector<8x16xf32>
    %219 = arith.mulf %147, %218 : vector<8x16xf32>
    %220 = arith.addf %160, %219 : vector<8x16xf32>
    %221 = math.tanh %220 : vector<8x16xf32>
    %222 = arith.mulf %153, %221 : vector<8x16xf32>
    %223 = vector.broadcast %139 : vector<8x1xf32> to vector<8x16xf32>
    %224 = arith.mulf %223, %222 : vector<8x16xf32>
    %cst_54 = arith.constant 1.000000e+00 : f32
    %225 = vector.broadcast %cst_54 : f32 to vector<8x1xf32>
    %226 = arith.subf %225, %139 : vector<8x1xf32>
    %227 = vector.broadcast %226 : vector<8x1xf32> to vector<8x16xf32>
    %228 = arith.mulf %227, %110 : vector<8x16xf32>
    %229 = arith.addf %224, %228 : vector<8x16xf32>
    %230 = vector.broadcast %139 : vector<8x1xf32> to vector<8x16xf32>
    %231 = arith.mulf %230, %220 : vector<8x16xf32>
    %cst_55 = arith.constant 1.000000e+00 : f32
    %232 = vector.broadcast %cst_55 : f32 to vector<8x1xf32>
    %233 = arith.subf %232, %139 : vector<8x1xf32>
    %234 = vector.broadcast %233 : vector<8x1xf32> to vector<8x16xf32>
    %235 = arith.mulf %234, %117 : vector<8x16xf32>
    %236 = arith.addf %231, %235 : vector<8x16xf32>
    %c0_56 = arith.constant 0 : index
    %237 = arith.index_cast %133 : i32 to index
    %c0_57 = arith.constant 0 : index
    %c0_58 = arith.constant 0 : index
    %238 = vector.load %arg5[%c0_56, %237, %c0_57, %c0_58] : memref<1x4x8x16xf32, #tpu.memory_space<vmem>>, vector<1x1x8x16xf32>
    %239 = vector.shape_cast %238 : vector<1x1x8x16xf32> to vector<8x16xf32>
    %240 = vector.shape_cast %229 : vector<8x16xf32> to vector<1x1x8x16xf32>
    tpu.vector_store %arg5[%c0_56, %237, %c0_57, %c0_58], %240 {strides = array<i32>} : memref<1x4x8x16xf32, #tpu.memory_space<vmem>>, vector<1x1x8x16xf32>,
    %c0_59 = arith.constant 0 : index
    %241 = arith.index_cast %133 : i32 to index
    %c0_60 = arith.constant 0 : index
    %c0_61 = arith.constant 0 : index
    %242 = vector.load %arg6[%c0_59, %241, %c0_60, %c0_61] : memref<1x4x8x16xf32, #tpu.memory_space<vmem>>, vector<1x1x8x16xf32>
    %243 = vector.shape_cast %242 : vector<1x1x8x16xf32> to vector<8x16xf32>
    %244 = vector.shape_cast %236 : vector<8x16xf32> to vector<1x1x8x16xf32>
    tpu.vector_store %arg6[%c0_59, %241, %c0_60, %c0_61], %244 {strides = array<i32>} : memref<1x4x8x16xf32, #tpu.memory_space<vmem>>, vector<1x1x8x16xf32>,
    %c0_62 = arith.constant 0 : index
    %245 = arith.index_cast %133 : i32 to index
    %c0_63 = arith.constant 0 : index
    %c0_64 = arith.constant 0 : index
    %246 = vector.load %arg7[%c0_62, %245, %c0_63, %c0_64] : memref<1x4x8x4xf32, #tpu.memory_space<vmem>>, vector<1x1x8x4xf32>
    %247 = vector.shape_cast %246 : vector<1x1x8x4xf32> to vector<8x4xf32>
    %248 = vector.shape_cast %199 : vector<8x4xf32> to vector<1x1x8x4xf32>
    tpu.vector_store %arg7[%c0_62, %245, %c0_63, %c0_64], %248 {strides = array<i32>} : memref<1x4x8x4xf32, #tpu.memory_space<vmem>>, vector<1x1x8x4xf32>,
    %c2_i32_65 = arith.constant 2 : i32
    %c2_i32_66 = arith.constant 2 : i32
    %249 = arith.muli %c2_i32_66, %c2_i32_65 : i32
    %c3_i32_67 = arith.constant 3 : i32
    %250 = arith.subi %c3_i32_67, %249 : i32
    %251 = arith.muli %arg0, %250 : i32
    %252 = arith.addi %c2_i32_65, %251 : i32
    %c0_68 = arith.constant 0 : index
    %253 = arith.index_cast %252 : i32 to index
    %c0_69 = arith.constant 0 : index
    %c0_70 = arith.constant 0 : index
    %254 = vector.load %arg2[%c0_68, %253, %c0_69, %c0_70] : memref<1x4x8x112xf32, #tpu.memory_space<vmem>>, vector<1x1x8x112xf32>
    %255 = vector.shape_cast %254 : vector<1x1x8x112xf32> to vector<8x112xf32>
    %256 = arith.index_cast %252 : i32 to index
    %c0_71 = arith.constant 0 : index
    %c0_72 = arith.constant 0 : index
    %257 = vector.load %arg3[%256, %c0_71, %c0_72] : memref<4x8x1xf32, #tpu.memory_space<vmem>>, vector<1x8x1xf32>
    %258 = vector.shape_cast %257 : vector<1x8x1xf32> to vector<8x1xf32>
    %cst_73 = arith.constant dense<0.000000e+00> : vector<8x112xf32>
    %259 = tpu.matmul %229, %4, %cst_73 {dimension_numbers = #tpu.dot_dimension_numbers<[1], [0], [0], [1], [0, 0, 1, 1], [], []>} : vector<8x16xf32>, vector<16x112xf32>, vector<8x112xf32> -> vector<8x112xf32>
    %260 = arith.addf %255, %259 : vector<8x112xf32>
    %261 = vector.extract_strided_slice %260 {offsets = [0, 0], sizes = [8, 16], strides = [1, 1]} : vector<8x112xf32> to vector<8x16xf32>
    %262 = arith.negf %261 : vector<8x16xf32>
    %263 = math.exp %262 : vector<8x16xf32>
    %cst_74 = arith.constant 1.000000e+00 : f32
    %264 = vector.broadcast %cst_74 : f32 to vector<8x16xf32>
    %265 = arith.addf %264, %263 : vector<8x16xf32>
    %266 = arith.divf %264, %265 : vector<8x16xf32>
    %267 = vector.extract_strided_slice %260 {offsets = [0, 16], sizes = [8, 16], strides = [1, 1]} : vector<8x112xf32> to vector<8x16xf32>
    %268 = arith.negf %267 : vector<8x16xf32>
    %269 = math.exp %268 : vector<8x16xf32>
    %cst_75 = arith.constant 1.000000e+00 : f32
    %270 = vector.broadcast %cst_75 : f32 to vector<8x16xf32>
    %271 = arith.addf %270, %269 : vector<8x16xf32>
    %272 = arith.divf %270, %271 : vector<8x16xf32>
    %cst_76 = arith.constant 1.000000e+00 : f32
    %273 = vector.broadcast %cst_76 : f32 to vector<8x16xf32>
    %274 = arith.subf %273, %266 : vector<8x16xf32>
    %275 = vector.extract_strided_slice %260 {offsets = [0, 32], sizes = [8, 64], strides = [1, 1]} : vector<8x112xf32> to vector<8x64xf32>
    %276 = math.tanh %275 : vector<8x64xf32>
    %277 = vector.extract_strided_slice %260 {offsets = [0, 96], sizes = [8, 16], strides = [1, 1]} : vector<8x112xf32> to vector<8x16xf32>
    %278 = math.tanh %277 : vector<8x16xf32>
    %279 = arith.mulf %274, %236 : vector<8x16xf32>
    %280 = arith.mulf %279, %278 : vector<8x16xf32>
    %cst_77 = arith.constant dense<0.000000e+00> : vector<8xf32>
    %281 = vector.multi_reduction <add>, %280, %cst_77 [1] : vector<8x16xf32> to vector<8xf32>
    %282 = vector.shape_cast %281 : vector<8xf32> to vector<8x1xf32>
    %283 = arith.mulf %266, %278 : vector<8x16xf32>
    %284 = vector.extract_strided_slice %276 {offsets = [0, 0], sizes = [8, 16], strides = [1, 1]} : vector<8x64xf32> to vector<8x16xf32>
    %285 = arith.mulf %283, %284 : vector<8x16xf32>
    %cst_78 = arith.constant dense<0.000000e+00> : vector<8xf32>
    %286 = vector.multi_reduction <add>, %285, %cst_78 [1] : vector<8x16xf32> to vector<8xf32>
    %287 = vector.shape_cast %286 : vector<8xf32> to vector<8x1xf32>
    %288 = arith.addf %282, %287 : vector<8x1xf32>
    %289 = vector.extract_strided_slice %276 {offsets = [0, 16], sizes = [8, 16], strides = [1, 1]} : vector<8x64xf32> to vector<8x16xf32>
    %290 = arith.mulf %283, %289 : vector<8x16xf32>
    %cst_79 = arith.constant dense<0.000000e+00> : vector<8xf32>
    %291 = vector.multi_reduction <add>, %290, %cst_79 [1] : vector<8x16xf32> to vector<8xf32>
    %292 = vector.shape_cast %291 : vector<8xf32> to vector<8x1xf32>
    %293 = arith.addf %282, %292 : vector<8x1xf32>
    %294 = vector.extract_strided_slice %276 {offsets = [0, 32], sizes = [8, 16], strides = [1, 1]} : vector<8x64xf32> to vector<8x16xf32>
    %295 = arith.mulf %283, %294 : vector<8x16xf32>
    %cst_80 = arith.constant dense<0.000000e+00> : vector<8xf32>
    %296 = vector.multi_reduction <add>, %295, %cst_80 [1] : vector<8x16xf32> to vector<8xf32>
    %297 = vector.shape_cast %296 : vector<8xf32> to vector<8x1xf32>
    %298 = arith.addf %282, %297 : vector<8x1xf32>
    %299 = vector.extract_strided_slice %276 {offsets = [0, 48], sizes = [8, 16], strides = [1, 1]} : vector<8x64xf32> to vector<8x16xf32>
    %300 = arith.mulf %283, %299 : vector<8x16xf32>
    %cst_81 = arith.constant dense<0.000000e+00> : vector<8xf32>
    %301 = vector.multi_reduction <add>, %300, %cst_81 [1] : vector<8x16xf32> to vector<8xf32>
    %302 = vector.shape_cast %301 : vector<8xf32> to vector<8x1xf32>
    %303 = arith.addf %282, %302 : vector<8x1xf32>
    %304 = tpu.concatenate %288, %293, %298, %303 in 1 : vector<8x1xf32>, vector<8x1xf32>, vector<8x1xf32>, vector<8x1xf32> -> vector<8x4xf32>
    %cst_82 = arith.constant dense<0xFF800000> : vector<8xf32>
    %305 = vector.multi_reduction <maximumf>, %304, %cst_82 [1] : vector<8x4xf32> to vector<8xf32>
    %306 = vector.shape_cast %305 : vector<8xf32> to vector<8x1xf32>
    %307 = vector.broadcast %306 : vector<8x1xf32> to vector<8x4xf32>
    %308 = arith.subf %304, %307 : vector<8x4xf32>
    %309 = math.exp %308 : vector<8x4xf32>
    %cst_83 = arith.constant dense<0.000000e+00> : vector<8xf32>
    %310 = vector.multi_reduction <add>, %309, %cst_83 [1] : vector<8x4xf32> to vector<8xf32>
    %311 = vector.shape_cast %310 : vector<8xf32> to vector<8x1xf32>
    %312 = tpu.reciprocal %311 {approx = true} : vector<8x1xf32> -> vector<8x1xf32>
    %313 = arith.mulf %311, %312 : vector<8x1xf32>
    %cst_84 = arith.constant 2.000000e+00 : f32
    %314 = vector.broadcast %cst_84 : f32 to vector<8x1xf32>
    %315 = arith.subf %314, %313 : vector<8x1xf32>
    %316 = arith.mulf %312, %315 : vector<8x1xf32>
    %317 = vector.broadcast %316 : vector<8x1xf32> to vector<8x4xf32>
    %318 = arith.mulf %309, %317 : vector<8x4xf32>
    %319 = vector.extract_strided_slice %318 {offsets = [0, 0], sizes = [8, 1], strides = [1, 1]} : vector<8x4xf32> to vector<8x1xf32>
    %320 = vector.extract_strided_slice %276 {offsets = [0, 0], sizes = [8, 16], strides = [1, 1]} : vector<8x64xf32> to vector<8x16xf32>
    %321 = vector.broadcast %319 : vector<8x1xf32> to vector<8x16xf32>
    %322 = arith.mulf %321, %320 : vector<8x16xf32>
    %323 = vector.extract_strided_slice %318 {offsets = [0, 1], sizes = [8, 1], strides = [1, 1]} : vector<8x4xf32> to vector<8x1xf32>
    %324 = vector.extract_strided_slice %276 {offsets = [0, 16], sizes = [8, 16], strides = [1, 1]} : vector<8x64xf32> to vector<8x16xf32>
    %325 = vector.broadcast %323 : vector<8x1xf32> to vector<8x16xf32>
    %326 = arith.mulf %325, %324 : vector<8x16xf32>
    %327 = arith.addf %322, %326 : vector<8x16xf32>
    %328 = vector.extract_strided_slice %318 {offsets = [0, 2], sizes = [8, 1], strides = [1, 1]} : vector<8x4xf32> to vector<8x1xf32>
    %329 = vector.extract_strided_slice %276 {offsets = [0, 32], sizes = [8, 16], strides = [1, 1]} : vector<8x64xf32> to vector<8x16xf32>
    %330 = vector.broadcast %328 : vector<8x1xf32> to vector<8x16xf32>
    %331 = arith.mulf %330, %329 : vector<8x16xf32>
    %332 = arith.addf %327, %331 : vector<8x16xf32>
    %333 = vector.extract_strided_slice %318 {offsets = [0, 3], sizes = [8, 1], strides = [1, 1]} : vector<8x4xf32> to vector<8x1xf32>
    %334 = vector.extract_strided_slice %276 {offsets = [0, 48], sizes = [8, 16], strides = [1, 1]} : vector<8x64xf32> to vector<8x16xf32>
    %335 = vector.broadcast %333 : vector<8x1xf32> to vector<8x16xf32>
    %336 = arith.mulf %335, %334 : vector<8x16xf32>
    %337 = arith.addf %332, %336 : vector<8x16xf32>
    %338 = arith.mulf %266, %337 : vector<8x16xf32>
    %339 = arith.addf %279, %338 : vector<8x16xf32>
    %340 = math.tanh %339 : vector<8x16xf32>
    %341 = arith.mulf %272, %340 : vector<8x16xf32>
    %342 = vector.broadcast %258 : vector<8x1xf32> to vector<8x16xf32>
    %343 = arith.mulf %342, %341 : vector<8x16xf32>
    %cst_85 = arith.constant 1.000000e+00 : f32
    %344 = vector.broadcast %cst_85 : f32 to vector<8x1xf32>
    %345 = arith.subf %344, %258 : vector<8x1xf32>
    %346 = vector.broadcast %345 : vector<8x1xf32> to vector<8x16xf32>
    %347 = arith.mulf %346, %229 : vector<8x16xf32>
    %348 = arith.addf %343, %347 : vector<8x16xf32>
    %349 = vector.broadcast %258 : vector<8x1xf32> to vector<8x16xf32>
    %350 = arith.mulf %349, %339 : vector<8x16xf32>
    %cst_86 = arith.constant 1.000000e+00 : f32
    %351 = vector.broadcast %cst_86 : f32 to vector<8x1xf32>
    %352 = arith.subf %351, %258 : vector<8x1xf32>
    %353 = vector.broadcast %352 : vector<8x1xf32> to vector<8x16xf32>
    %354 = arith.mulf %353, %236 : vector<8x16xf32>
    %355 = arith.addf %350, %354 : vector<8x16xf32>
    %c0_87 = arith.constant 0 : index
    %356 = arith.index_cast %252 : i32 to index
    %c0_88 = arith.constant 0 : index
    %c0_89 = arith.constant 0 : index
    %357 = vector.load %arg5[%c0_87, %356, %c0_88, %c0_89] : memref<1x4x8x16xf32, #tpu.memory_space<vmem>>, vector<1x1x8x16xf32>
    %358 = vector.shape_cast %357 : vector<1x1x8x16xf32> to vector<8x16xf32>
    %359 = vector.shape_cast %348 : vector<8x16xf32> to vector<1x1x8x16xf32>
    tpu.vector_store %arg5[%c0_87, %356, %c0_88, %c0_89], %359 {strides = array<i32>} : memref<1x4x8x16xf32, #tpu.memory_space<vmem>>, vector<1x1x8x16xf32>,
    %c0_90 = arith.constant 0 : index
    %360 = arith.index_cast %252 : i32 to index
    %c0_91 = arith.constant 0 : index
    %c0_92 = arith.constant 0 : index
    %361 = vector.load %arg6[%c0_90, %360, %c0_91, %c0_92] : memref<1x4x8x16xf32, #tpu.memory_space<vmem>>, vector<1x1x8x16xf32>
    %362 = vector.shape_cast %361 : vector<1x1x8x16xf32> to vector<8x16xf32>
    %363 = vector.shape_cast %355 : vector<8x16xf32> to vector<1x1x8x16xf32>
    tpu.vector_store %arg6[%c0_90, %360, %c0_91, %c0_92], %363 {strides = array<i32>} : memref<1x4x8x16xf32, #tpu.memory_space<vmem>>, vector<1x1x8x16xf32>,
    %c0_93 = arith.constant 0 : index
    %364 = arith.index_cast %252 : i32 to index
    %c0_94 = arith.constant 0 : index
    %c0_95 = arith.constant 0 : index
    %365 = vector.load %arg7[%c0_93, %364, %c0_94, %c0_95] : memref<1x4x8x4xf32, #tpu.memory_space<vmem>>, vector<1x1x8x4xf32>
    %366 = vector.shape_cast %365 : vector<1x1x8x4xf32> to vector<8x4xf32>
    %367 = vector.shape_cast %318 : vector<8x4xf32> to vector<1x1x8x4xf32>
    tpu.vector_store %arg7[%c0_93, %364, %c0_94, %c0_95], %367 {strides = array<i32>} : memref<1x4x8x4xf32, #tpu.memory_space<vmem>>, vector<1x1x8x4xf32>,
    %c3_i32_96 = arith.constant 3 : i32
    %c2_i32_97 = arith.constant 2 : i32
    %368 = arith.muli %c2_i32_97, %c3_i32_96 : i32
    %c3_i32_98 = arith.constant 3 : i32
    %369 = arith.subi %c3_i32_98, %368 : i32
    %370 = arith.muli %arg0, %369 : i32
    %371 = arith.addi %c3_i32_96, %370 : i32
    %c0_99 = arith.constant 0 : index
    %372 = arith.index_cast %371 : i32 to index
    %c0_100 = arith.constant 0 : index
    %c0_101 = arith.constant 0 : index
    %373 = vector.load %arg2[%c0_99, %372, %c0_100, %c0_101] : memref<1x4x8x112xf32, #tpu.memory_space<vmem>>, vector<1x1x8x112xf32>
    %374 = vector.shape_cast %373 : vector<1x1x8x112xf32> to vector<8x112xf32>
    %375 = arith.index_cast %371 : i32 to index
    %c0_102 = arith.constant 0 : index
    %c0_103 = arith.constant 0 : index
    %376 = vector.load %arg3[%375, %c0_102, %c0_103] : memref<4x8x1xf32, #tpu.memory_space<vmem>>, vector<1x8x1xf32>
    %377 = vector.shape_cast %376 : vector<1x8x1xf32> to vector<8x1xf32>
    %cst_104 = arith.constant dense<0.000000e+00> : vector<8x112xf32>
    %378 = tpu.matmul %348, %4, %cst_104 {dimension_numbers = #tpu.dot_dimension_numbers<[1], [0], [0], [1], [0, 0, 1, 1], [], []>} : vector<8x16xf32>, vector<16x112xf32>, vector<8x112xf32> -> vector<8x112xf32>
    %379 = arith.addf %374, %378 : vector<8x112xf32>
    %380 = vector.extract_strided_slice %379 {offsets = [0, 0], sizes = [8, 16], strides = [1, 1]} : vector<8x112xf32> to vector<8x16xf32>
    %381 = arith.negf %380 : vector<8x16xf32>
    %382 = math.exp %381 : vector<8x16xf32>
    %cst_105 = arith.constant 1.000000e+00 : f32
    %383 = vector.broadcast %cst_105 : f32 to vector<8x16xf32>
    %384 = arith.addf %383, %382 : vector<8x16xf32>
    %385 = arith.divf %383, %384 : vector<8x16xf32>
    %386 = vector.extract_strided_slice %379 {offsets = [0, 16], sizes = [8, 16], strides = [1, 1]} : vector<8x112xf32> to vector<8x16xf32>
    %387 = arith.negf %386 : vector<8x16xf32>
    %388 = math.exp %387 : vector<8x16xf32>
    %cst_106 = arith.constant 1.000000e+00 : f32
    %389 = vector.broadcast %cst_106 : f32 to vector<8x16xf32>
    %390 = arith.addf %389, %388 : vector<8x16xf32>
    %391 = arith.divf %389, %390 : vector<8x16xf32>
    %cst_107 = arith.constant 1.000000e+00 : f32
    %392 = vector.broadcast %cst_107 : f32 to vector<8x16xf32>
    %393 = arith.subf %392, %385 : vector<8x16xf32>
    %394 = vector.extract_strided_slice %379 {offsets = [0, 32], sizes = [8, 64], strides = [1, 1]} : vector<8x112xf32> to vector<8x64xf32>
    %395 = math.tanh %394 : vector<8x64xf32>
    %396 = vector.extract_strided_slice %379 {offsets = [0, 96], sizes = [8, 16], strides = [1, 1]} : vector<8x112xf32> to vector<8x16xf32>
    %397 = math.tanh %396 : vector<8x16xf32>
    %398 = arith.mulf %393, %355 : vector<8x16xf32>
    %399 = arith.mulf %398, %397 : vector<8x16xf32>
    %cst_108 = arith.constant dense<0.000000e+00> : vector<8xf32>
    %400 = vector.multi_reduction <add>, %399, %cst_108 [1] : vector<8x16xf32> to vector<8xf32>
    %401 = vector.shape_cast %400 : vector<8xf32> to vector<8x1xf32>
    %402 = arith.mulf %385, %397 : vector<8x16xf32>
    %403 = vector.extract_strided_slice %395 {offsets = [0, 0], sizes = [8, 16], strides = [1, 1]} : vector<8x64xf32> to vector<8x16xf32>
    %404 = arith.mulf %402, %403 : vector<8x16xf32>
    %cst_109 = arith.constant dense<0.000000e+00> : vector<8xf32>
    %405 = vector.multi_reduction <add>, %404, %cst_109 [1] : vector<8x16xf32> to vector<8xf32>
    %406 = vector.shape_cast %405 : vector<8xf32> to vector<8x1xf32>
    %407 = arith.addf %401, %406 : vector<8x1xf32>
    %408 = vector.extract_strided_slice %395 {offsets = [0, 16], sizes = [8, 16], strides = [1, 1]} : vector<8x64xf32> to vector<8x16xf32>
    %409 = arith.mulf %402, %408 : vector<8x16xf32>
    %cst_110 = arith.constant dense<0.000000e+00> : vector<8xf32>
    %410 = vector.multi_reduction <add>, %409, %cst_110 [1] : vector<8x16xf32> to vector<8xf32>
    %411 = vector.shape_cast %410 : vector<8xf32> to vector<8x1xf32>
    %412 = arith.addf %401, %411 : vector<8x1xf32>
    %413 = vector.extract_strided_slice %395 {offsets = [0, 32], sizes = [8, 16], strides = [1, 1]} : vector<8x64xf32> to vector<8x16xf32>
    %414 = arith.mulf %402, %413 : vector<8x16xf32>
    %cst_111 = arith.constant dense<0.000000e+00> : vector<8xf32>
    %415 = vector.multi_reduction <add>, %414, %cst_111 [1] : vector<8x16xf32> to vector<8xf32>
    %416 = vector.shape_cast %415 : vector<8xf32> to vector<8x1xf32>
    %417 = arith.addf %401, %416 : vector<8x1xf32>
    %418 = vector.extract_strided_slice %395 {offsets = [0, 48], sizes = [8, 16], strides = [1, 1]} : vector<8x64xf32> to vector<8x16xf32>
    %419 = arith.mulf %402, %418 : vector<8x16xf32>
    %cst_112 = arith.constant dense<0.000000e+00> : vector<8xf32>
    %420 = vector.multi_reduction <add>, %419, %cst_112 [1] : vector<8x16xf32> to vector<8xf32>
    %421 = vector.shape_cast %420 : vector<8xf32> to vector<8x1xf32>
    %422 = arith.addf %401, %421 : vector<8x1xf32>
    %423 = tpu.concatenate %407, %412, %417, %422 in 1 : vector<8x1xf32>, vector<8x1xf32>, vector<8x1xf32>, vector<8x1xf32> -> vector<8x4xf32>
    %cst_113 = arith.constant dense<0xFF800000> : vector<8xf32>
    %424 = vector.multi_reduction <maximumf>, %423, %cst_113 [1] : vector<8x4xf32> to vector<8xf32>
    %425 = vector.shape_cast %424 : vector<8xf32> to vector<8x1xf32>
    %426 = vector.broadcast %425 : vector<8x1xf32> to vector<8x4xf32>
    %427 = arith.subf %423, %426 : vector<8x4xf32>
    %428 = math.exp %427 : vector<8x4xf32>
    %cst_114 = arith.constant dense<0.000000e+00> : vector<8xf32>
    %429 = vector.multi_reduction <add>, %428, %cst_114 [1] : vector<8x4xf32> to vector<8xf32>
    %430 = vector.shape_cast %429 : vector<8xf32> to vector<8x1xf32>
    %431 = tpu.reciprocal %430 {approx = true} : vector<8x1xf32> -> vector<8x1xf32>
    %432 = arith.mulf %430, %431 : vector<8x1xf32>
    %cst_115 = arith.constant 2.000000e+00 : f32
    %433 = vector.broadcast %cst_115 : f32 to vector<8x1xf32>
    %434 = arith.subf %433, %432 : vector<8x1xf32>
    %435 = arith.mulf %431, %434 : vector<8x1xf32>
    %436 = vector.broadcast %435 : vector<8x1xf32> to vector<8x4xf32>
    %437 = arith.mulf %428, %436 : vector<8x4xf32>
    %438 = vector.extract_strided_slice %437 {offsets = [0, 0], sizes = [8, 1], strides = [1, 1]} : vector<8x4xf32> to vector<8x1xf32>
    %439 = vector.extract_strided_slice %395 {offsets = [0, 0], sizes = [8, 16], strides = [1, 1]} : vector<8x64xf32> to vector<8x16xf32>
    %440 = vector.broadcast %438 : vector<8x1xf32> to vector<8x16xf32>
    %441 = arith.mulf %440, %439 : vector<8x16xf32>
    %442 = vector.extract_strided_slice %437 {offsets = [0, 1], sizes = [8, 1], strides = [1, 1]} : vector<8x4xf32> to vector<8x1xf32>
    %443 = vector.extract_strided_slice %395 {offsets = [0, 16], sizes = [8, 16], strides = [1, 1]} : vector<8x64xf32> to vector<8x16xf32>
    %444 = vector.broadcast %442 : vector<8x1xf32> to vector<8x16xf32>
    %445 = arith.mulf %444, %443 : vector<8x16xf32>
    %446 = arith.addf %441, %445 : vector<8x16xf32>
    %447 = vector.extract_strided_slice %437 {offsets = [0, 2], sizes = [8, 1], strides = [1, 1]} : vector<8x4xf32> to vector<8x1xf32>
    %448 = vector.extract_strided_slice %395 {offsets = [0, 32], sizes = [8, 16], strides = [1, 1]} : vector<8x64xf32> to vector<8x16xf32>
    %449 = vector.broadcast %447 : vector<8x1xf32> to vector<8x16xf32>
    %450 = arith.mulf %449, %448 : vector<8x16xf32>
    %451 = arith.addf %446, %450 : vector<8x16xf32>
    %452 = vector.extract_strided_slice %437 {offsets = [0, 3], sizes = [8, 1], strides = [1, 1]} : vector<8x4xf32> to vector<8x1xf32>
    %453 = vector.extract_strided_slice %395 {offsets = [0, 48], sizes = [8, 16], strides = [1, 1]} : vector<8x64xf32> to vector<8x16xf32>
    %454 = vector.broadcast %452 : vector<8x1xf32> to vector<8x16xf32>
    %455 = arith.mulf %454, %453 : vector<8x16xf32>
    %456 = arith.addf %451, %455 : vector<8x16xf32>
    %457 = arith.mulf %385, %456 : vector<8x16xf32>
    %458 = arith.addf %398, %457 : vector<8x16xf32>
    %459 = math.tanh %458 : vector<8x16xf32>
    %460 = arith.mulf %391, %459 : vector<8x16xf32>
    %461 = vector.broadcast %377 : vector<8x1xf32> to vector<8x16xf32>
    %462 = arith.mulf %461, %460 : vector<8x16xf32>
    %cst_116 = arith.constant 1.000000e+00 : f32
    %463 = vector.broadcast %cst_116 : f32 to vector<8x1xf32>
    %464 = arith.subf %463, %377 : vector<8x1xf32>
    %465 = vector.broadcast %464 : vector<8x1xf32> to vector<8x16xf32>
    %466 = arith.mulf %465, %348 : vector<8x16xf32>
    %467 = arith.addf %462, %466 : vector<8x16xf32>
    %468 = vector.broadcast %377 : vector<8x1xf32> to vector<8x16xf32>
    %469 = arith.mulf %468, %458 : vector<8x16xf32>
    %cst_117 = arith.constant 1.000000e+00 : f32
    %470 = vector.broadcast %cst_117 : f32 to vector<8x1xf32>
    %471 = arith.subf %470, %377 : vector<8x1xf32>
    %472 = vector.broadcast %471 : vector<8x1xf32> to vector<8x16xf32>
    %473 = arith.mulf %472, %355 : vector<8x16xf32>
    %474 = arith.addf %469, %473 : vector<8x16xf32>
    %c0_118 = arith.constant 0 : index
    %475 = arith.index_cast %371 : i32 to index
    %c0_119 = arith.constant 0 : index
    %c0_120 = arith.constant 0 : index
    %476 = vector.load %arg5[%c0_118, %475, %c0_119, %c0_120] : memref<1x4x8x16xf32, #tpu.memory_space<vmem>>, vector<1x1x8x16xf32>
    %477 = vector.shape_cast %476 : vector<1x1x8x16xf32> to vector<8x16xf32>
    %478 = vector.shape_cast %467 : vector<8x16xf32> to vector<1x1x8x16xf32>
    tpu.vector_store %arg5[%c0_118, %475, %c0_119, %c0_120], %478 {strides = array<i32>} : memref<1x4x8x16xf32, #tpu.memory_space<vmem>>, vector<1x1x8x16xf32>,
    %c0_121 = arith.constant 0 : index
    %479 = arith.index_cast %371 : i32 to index
    %c0_122 = arith.constant 0 : index
    %c0_123 = arith.constant 0 : index
    %480 = vector.load %arg6[%c0_121, %479, %c0_122, %c0_123] : memref<1x4x8x16xf32, #tpu.memory_space<vmem>>, vector<1x1x8x16xf32>
    %481 = vector.shape_cast %480 : vector<1x1x8x16xf32> to vector<8x16xf32>
    %482 = vector.shape_cast %474 : vector<8x16xf32> to vector<1x1x8x16xf32>
    tpu.vector_store %arg6[%c0_121, %479, %c0_122, %c0_123], %482 {strides = array<i32>} : memref<1x4x8x16xf32, #tpu.memory_space<vmem>>, vector<1x1x8x16xf32>,
    %c0_124 = arith.constant 0 : index
    %483 = arith.index_cast %371 : i32 to index
    %c0_125 = arith.constant 0 : index
    %c0_126 = arith.constant 0 : index
    %484 = vector.load %arg7[%c0_124, %483, %c0_125, %c0_126] : memref<1x4x8x4xf32, #tpu.memory_space<vmem>>, vector<1x1x8x4xf32>
    %485 = vector.shape_cast %484 : vector<1x1x8x4xf32> to vector<8x4xf32>
    %486 = vector.shape_cast %437 : vector<8x4xf32> to vector<1x1x8x4xf32>
    tpu.vector_store %arg7[%c0_124, %483, %c0_125, %c0_126], %486 {strides = array<i32>} : memref<1x4x8x4xf32, #tpu.memory_space<vmem>>, vector<1x1x8x4xf32>,
    %c4_i32 = arith.constant 4 : i32
    %487 = arith.index_cast %arg0 : i32 to index
    %c0_127 = arith.constant 0 : index
    %c0_128 = arith.constant 0 : index
    %488 = vector.load %arg8[%487, %c0_127, %c0_128] : memref<2x8x16xf32, #tpu.memory_space<vmem>>, vector<1x8x16xf32>
    %489 = vector.shape_cast %488 : vector<1x8x16xf32> to vector<8x16xf32>
    %490 = vector.shape_cast %467 : vector<8x16xf32> to vector<1x8x16xf32>
    tpu.vector_store %arg8[%487, %c0_127, %c0_128], %490 {strides = array<i32>} : memref<2x8x16xf32, #tpu.memory_space<vmem>>, vector<1x8x16xf32>,
    %491 = arith.index_cast %arg0 : i32 to index
    %c0_129 = arith.constant 0 : index
    %c0_130 = arith.constant 0 : index
    %492 = vector.load %arg9[%491, %c0_129, %c0_130] : memref<2x8x16xf32, #tpu.memory_space<vmem>>, vector<1x8x16xf32>
    %493 = vector.shape_cast %492 : vector<1x8x16xf32> to vector<8x16xf32>
    %494 = vector.shape_cast %474 : vector<8x16xf32> to vector<1x8x16xf32>
    tpu.vector_store %arg9[%491, %c0_129, %c0_130], %494 {strides = array<i32>} : memref<2x8x16xf32, #tpu.memory_space<vmem>>, vector<1x8x16xf32>,
    return
  }
  func.func @transform_0(%arg0: i32, %arg1: i32) -> (i32, i32, i32, i32) {
    %c2_i32 = arith.constant 2 : i32
    %0 = arith.muli %c2_i32, %arg1 : i32
    %c1_i32 = arith.constant 1 : i32
    %1 = arith.subi %c1_i32, %0 : i32
    %2 = arith.muli %arg0, %1 : i32
    %3 = arith.addi %arg1, %2 : i32
    %c0_i32 = arith.constant 0 : i32
    %c0_i32_0 = arith.constant 0 : i32
    %c0_i32_1 = arith.constant 0 : i32
    return %arg0, %3, %c0_i32, %c0_i32_0 : i32, i32, i32, i32
  }
  func.func @transform_1(%arg0: i32, %arg1: i32) -> (i32, i32, i32) {
    %c2_i32 = arith.constant 2 : i32
    %0 = arith.muli %c2_i32, %arg1 : i32
    %c1_i32 = arith.constant 1 : i32
    %1 = arith.subi %c1_i32, %0 : i32
    %2 = arith.muli %arg0, %1 : i32
    %3 = arith.addi %arg1, %2 : i32
    %c0_i32 = arith.constant 0 : i32
    %c0_i32_0 = arith.constant 0 : i32
    %c0_i32_1 = arith.constant 0 : i32
    return %3, %c0_i32, %c0_i32_0 : i32, i32, i32
  }
  func.func @transform_2(%arg0: i32, %arg1: i32) -> (i32, i32, i32) {
    %c0_i32 = arith.constant 0 : i32
    %c0_i32_0 = arith.constant 0 : i32
    %c0_i32_1 = arith.constant 0 : i32
    return %arg0, %c0_i32, %c0_i32_0 : i32, i32, i32
  }
  func.func @transform_3(%arg0: i32, %arg1: i32) -> (i32, i32, i32, i32) {
    %c2_i32 = arith.constant 2 : i32
    %0 = arith.muli %c2_i32, %arg1 : i32
    %c1_i32 = arith.constant 1 : i32
    %1 = arith.subi %c1_i32, %0 : i32
    %2 = arith.muli %arg0, %1 : i32
    %3 = arith.addi %arg1, %2 : i32
    %c0_i32 = arith.constant 0 : i32
    %c0_i32_0 = arith.constant 0 : i32
    %c0_i32_1 = arith.constant 0 : i32
    return %arg0, %3, %c0_i32, %c0_i32_0 : i32, i32, i32, i32
  }
  func.func @transform_4(%arg0: i32, %arg1: i32) -> (i32, i32, i32, i32) {
    %c2_i32 = arith.constant 2 : i32
    %0 = arith.muli %c2_i32, %arg1 : i32
    %c1_i32 = arith.constant 1 : i32
    %1 = arith.subi %c1_i32, %0 : i32
    %2 = arith.muli %arg0, %1 : i32
    %3 = arith.addi %arg1, %2 : i32
    %c0_i32 = arith.constant 0 : i32
    %c0_i32_0 = arith.constant 0 : i32
    %c0_i32_1 = arith.constant 0 : i32
    return %arg0, %3, %c0_i32, %c0_i32_0 : i32, i32, i32, i32
  }
  func.func @transform_5(%arg0: i32, %arg1: i32) -> (i32, i32, i32, i32) {
    %c2_i32 = arith.constant 2 : i32
    %0 = arith.muli %c2_i32, %arg1 : i32
    %c1_i32 = arith.constant 1 : i32
    %1 = arith.subi %c1_i32, %0 : i32
    %2 = arith.muli %arg0, %1 : i32
    %3 = arith.addi %arg1, %2 : i32
    %c0_i32 = arith.constant 0 : i32
    %c0_i32_0 = arith.constant 0 : i32
    %c0_i32_1 = arith.constant 0 : i32
    return %arg0, %3, %c0_i32, %c0_i32_0 : i32, i32, i32, i32
  }
}

</mosaic_0001>

<llo_original>
// kernel: tpu_custom_call.1
$region0: #{tpu_custom_call.1}
  #allocation0 [shape = 'u32[]', space=smem, size = 0x4, offset = 0x4, fixed_abs, tag = 'smem constant byte address 0x4 - core index']
  #allocation1 [shape = 'u32[144,128]{1,0:T(1,128)}', space=vmem, size = 0x12000, scoped, tag = 'internal scratch']
  #allocation2 [shape = 'f32[2,8,16]{2,1,0:T(8,128)}', space=vmem, size = 0x2000, scoped, tag = 'scratch operand']
  #allocation3 [shape = 'f32[2,8,16]{2,1,0:T(8,128)}', space=vmem, size = 0x2000, scoped, tag = 'scratch operand']
  %s0 = inlined_call_operand.hbm [shape: f32[2,8,8,112], index: 0, kind: input, shape index: {}]
  %s1 = inlined_call_operand.vmem [shape: f32[8,8,1], index: 1, kind: input, shape index: {}]
  %s2 = inlined_call_operand.vmem [shape: f32[2,16,112], index: 2, kind: input, shape index: {}]
  %s3 = inlined_call_operand.hbm [shape: f32[2,8,8,16], index: 3, kind: output, shape index: {0}]
  %s4 = inlined_call_operand.hbm [shape: f32[2,8,8,16], index: 4, kind: output, shape index: {1}]
  %s5 = inlined_call_operand.vmem [shape: f32[2,8,8,4], index: 5, kind: output, shape index: {2}]
  %6 = xla_tuple %s3, %s4, %s5
  %s7 = sld [smem:[#allocation0]]
  $region69: #{tpu_custom_call.1} parent=0
    _
  %s9 = ssub.s32 1, %s7
  %s10 = scalar_select 0, %s9, %s7
  $region1: #{tpu_custom_call.1} parent=0
    #allocation4 [shape = 'u8[32768]{0}', space=vmem, size = 0x8000, scoped, tag = 'input window, operand 0']
    #allocation5 [shape = 's32[2]{0}', space=sflag, size = 0x8, scoped, tag = 'scoped memory for tpu_custom_call.1']
    #allocation6 [shape = 's32[2]{0}', space=sflag, size = 0x8, scoped, tag = 'scoped memory for tpu_custom_call.1']
    #allocation7 [shape = 'u8[32768]{0}', space=vmem, size = 0x8000, scoped, tag = 'output window, operand 0']
    #allocation8 [shape = 'u8[32768]{0}', space=vmem, size = 0x8000, scoped, tag = 'output window, operand 1']
    #allocation9 [shape = 's32[2]{0}', space=sflag, size = 0x8, scoped, tag = 'scoped memory for tpu_custom_call.1']
    %11 = vsyncpa [#allocation5], 0
    %s12 = scalar_lea.sflag [#allocation5], 1
    %13 = vsyncpa %s12, 0
    %14 = vsyncpa [#allocation6], 0
    %s15 = scalar_lea.sflag [#allocation6], 1
    %16 = vsyncpa %s15, 0
    %17 = vsyncpa [#allocation9], 0
    %s18 = scalar_lea.sflag [#allocation9], 1
    %19 = vsyncpa %s18, 0
    loop: start=0, step=1, limit=6
    $region2: #{tpu_custom_call.1} parent=1 // loop_pre_header
      _
    $region3: #{tpu_custom_call.1} parent=1 // loop_header
      %s21 = sphi 0, %s25
      %p22 = scmp.ge.s32.totalorder %s21, 6
      %s28 = sphi 0, %s40
      %s29 = sphi 0, %s36
      %s30 = sphi 0, %s28
      %s31 = sphi 0, %s29
      %s32 = sphi 0, %s30
      %s33 = sphi 0, %s31
      %s53 = sphi 0, %s55
      %s56 = sphi 0, %s53
      %s57 = sphi 0, %s56
      %s73 = sphi 0, %s57
      %s87 = sphi 0, %s89
      %s90 = sphi 0, %s87
      %s91 = sphi 0, %s90
      %s107 = sphi 0, %s91
      %s113 = sphi 0, %s115
      %s116 = sphi 0, %s113
      %s117 = sphi 0, %s116
      %s133 = sphi 0, %s117
      %s149 = sphi 0, %s151
      %s152 = sphi 0, %s149
      %s153 = sphi 0, %s152
      %s169 = sphi 0, %s153
      %s185 = sphi 0, %s187
      %s188 = sphi 0, %s185
      %s189 = sphi 0, %s188
      %s205 = sphi 0, %s189
      %s221 = sphi 0, %s223
      %s224 = sphi 0, %s221
      %s225 = sphi 0, %s224
      %s241 = sphi 0, %s225
    $region4: #{tpu_custom_call.1} parent=1 // loop_header_branch
      %24 = sbr.rel (%p22) target = $region8
    $region5: #{tpu_custom_call.1} parent=1 // loop_body
      %s26 = ssub.s32 %s21, 1
      %s27 = ssub.s32 %s21, 2
      %s34 = sadd.s32 1, %s29
      %p35 = scmp.ge.s32.totalorder %s34, 2
      %s36 = scalar_select %p35, 0, %s34
      %s37 = sadd.s32 1, %s28
      %s38 = scalar_select %p35, %s37, %s28
      %p39 = scmp.ge.s32.totalorder %s38, 2
      %s40 = scalar_select %p39, 0, %s38
      %s41 = smul.u32 %s29, 2
      %s42 = ssub.s32 1, %s41
      %s43 = smul.u32 %s28, %s42
      %s44 = sadd.s32 %s29, %s43
      %s45 = smul.u32 %s36, 2
      %s46 = ssub.s32 1, %s45
      %s47 = smul.u32 %s40, %s46
      %s48 = sadd.s32 %s36, %s47
      %s49 = ssub.s32 %s28, %s40
      %s50 = ssub.s32 %s44, %s48
      %s51 = sor.u32 %s49, %s50
      %p52 = scmp.eq.s32.totalorder %s51, 0
      %s54 = sadd.s32 %s53, 1
      %s55 = scalar_select %p52, %s53, %s54
      %p58 = pneg %p52
      %p59 = scmp.eq.s32.totalorder %s21, 3
      %p60 = por %p58, %p59
      %p61 = scmp.ne.s32.totalorder %s53, %s56
      %p62 = scmp.eq.s32.totalorder %s21, 0
      %p63 = por %p61, %p62
      %p64 = scmp.ne.s32.totalorder %s53, %s56
      %p65 = scmp.eq.s32.totalorder %s26, 3
      %p66 = por %p64, %p65
      %p67 = scmp.ne.s32.totalorder %s56, %s57
      %p68 = scmp.eq.s32.totalorder %s26, 0
      %p69 = por %p67, %p68
      %p70 = scmp.ne.s32.totalorder %s56, %s57
      %p71 = scmp.eq.s32.totalorder %s27, 3
      %p72 = por %p70, %p71
      %p74 = scmp.ne.s32.totalorder %s57, %s73
      %p75 = scmp.eq.s32.totalorder %s27, 0
      %p76 = por %p74, %p75
      %s77 = smul.u32 %s29, 2
      %s78 = ssub.s32 1, %s77
      %s79 = smul.u32 %s28, %s78
      %s80 = sadd.s32 %s29, %s79
      %s81 = smul.u32 %s36, 2
      %s82 = ssub.s32 1, %s81
      %s83 = smul.u32 %s40, %s82
      %s84 = sadd.s32 %s36, %s83
      %s85 = ssub.s32 %s80, %s84
      %p86 = scmp.eq.s32.totalorder %s85, 0
      %s88 = sadd.s32 %s87, 1
      %s89 = scalar_select %p86, %s87, %s88
      %p92 = pneg %p86
      %p93 = scmp.eq.s32.totalorder %s21, 3
      %p94 = por %p92, %p93
      %p95 = scmp.ne.s32.totalorder %s87, %s90
      %p96 = scmp.eq.s32.totalorder %s21, 0
      %p97 = por %p95, %p96
      %p98 = scmp.ne.s32.totalorder %s87, %s90
      %p99 = scmp.eq.s32.totalorder %s26, 3
      %p100 = por %p98, %p99
      %p101 = scmp.ne.s32.totalorder %s90, %s91
      %p102 = scmp.eq.s32.totalorder %s26, 0
      %p103 = por %p101, %p102
      %p104 = scmp.ne.s32.totalorder %s90, %s91
      %p105 = scmp.eq.s32.totalorder %s27, 3
      %p106 = por %p104, %p105
      %p108 = scmp.ne.s32.totalorder %s91, %s107
      %p109 = scmp.eq.s32.totalorder %s27, 0
      %p110 = por %p108, %p109
      %s111 = ssub.s32 %s28, %s40
      %p112 = scmp.eq.s32.totalorder %s111, 0
      %s114 = sadd.s32 %s113, 1
      %s115 = scalar_select %p112, %s113, %s114
      %p118 = pneg %p112
      %p119 = scmp.eq.s32.totalorder %s21, 3
      %p120 = por %p118, %p119
      %p121 = scmp.ne.s32.totalorder %s113, %s116
      %p122 = scmp.eq.s32.totalorder %s21, 0
      %p123 = por %p121, %p122
      %p124 = scmp.ne.s32.totalorder %s113, %s116
      %p125 = scmp.eq.s32.totalorder %s26, 3
      %p126 = por %p124, %p125
      %p127 = scmp.ne.s32.totalorder %s116, %s117
      %p128 = scmp.eq.s32.totalorder %s26, 0
      %p129 = por %p127, %p128
      %p130 = scmp.ne.s32.totalorder %s116, %s117
      %p131 = scmp.eq.s32.totalorder %s27, 3
      %p132 = por %p130, %p131
      %p134 = scmp.ne.s32.totalorder %s117, %s133
      %p135 = scmp.eq.s32.totalorder %s27, 0
      %p136 = por %p134, %p135
      %s137 = smul.u32 %s29, 2
      %s138 = ssub.s32 1, %s137
      %s139 = smul.u32 %s28, %s138
      %s140 = sadd.s32 %s29, %s139
      %s141 = smul.u32 %s36, 2
      %s142 = ssub.s32 1, %s141
      %s143 = smul.u32 %s40, %s142
      %s144 = sadd.s32 %s36, %s143
      %s145 = ssub.s32 %s28, %s40
      %s146 = ssub.s32 %s140, %s144
      %s147 = sor.u32 %s145, %s146
      %p148 = scmp.eq.s32.totalorder %s147, 0
      %s150 = sadd.s32 %s149, 1
      %s151 = scalar_select %p148, %s149, %s150
      %p154 = pneg %p148
      %p155 = scmp.eq.s32.totalorder %s21, 3
      %p156 = por %p154, %p155
      %p157 = scmp.ne.s32.totalorder %s149, %s152
      %p158 = scmp.eq.s32.totalorder %s21, 0
      %p159 = por %p157, %p158
      %p160 = scmp.ne.s32.totalorder %s149, %s152
      %p161 = scmp.eq.s32.totalorder %s26, 3
      %p162 = por %p160, %p161
      %p163 = scmp.ne.s32.totalorder %s152, %s153
      %p164 = scmp.eq.s32.totalorder %s26, 0
      %p165 = por %p163, %p164
      %p166 = scmp.ne.s32.totalorder %s152, %s153
      %p167 = scmp.eq.s32.totalorder %s27, 3
      %p168 = por %p166, %p167
      %p170 = scmp.ne.s32.totalorder %s153, %s169
      %p171 = scmp.eq.s32.totalorder %s27, 0
      %p172 = por %p170, %p171
      %s173 = smul.u32 %s29, 2
      %s174 = ssub.s32 1, %s173
      %s175 = smul.u32 %s28, %s174
      %s176 = sadd.s32 %s29, %s175
      %s177 = smul.u32 %s36, 2
      %s178 = ssub.s32 1, %s177
      %s179 = smul.u32 %s40, %s178
      %s180 = sadd.s32 %s36, %s179
      %s181 = ssub.s32 %s28, %s40
      %s182 = ssub.s32 %s176, %s180
      %s183 = sor.u32 %s181, %s182
      %p184 = scmp.eq.s32.totalorder %s183, 0
      %s186 = sadd.s32 %s185, 1
      %s187 = scalar_select %p184, %s185, %s186
      %p190 = pneg %p184
      %p191 = scmp.eq.s32.totalorder %s21, 3
      %p192 = por %p190, %p191
      %p193 = scmp.ne.s32.totalorder %s185, %s188
      %p194 = scmp.eq.s32.totalorder %s21, 0
      %p195 = por %p193, %p194
      %p196 = scmp.ne.s32.totalorder %s185, %s188
      %p197 = scmp.eq.s32.totalorder %s26, 3
      %p198 = por %p196, %p197
      %p199 = scmp.ne.s32.totalorder %s188, %s189
      %p200 = scmp.eq.s32.totalorder %s26, 0
      %p201 = por %p199, %p200
      %p202 = scmp.ne.s32.totalorder %s188, %s189
      %p203 = scmp.eq.s32.totalorder %s27, 3
      %p204 = por %p202, %p203
      %p206 = scmp.ne.s32.totalorder %s189, %s205
      %p207 = scmp.eq.s32.totalorder %s27, 0
      %p208 = por %p206, %p207
      %s209 = smul.u32 %s29, 2
      %s210 = ssub.s32 1, %s209
      %s211 = smul.u32 %s28, %s210
      %s212 = sadd.s32 %s29, %s211
      %s213 = smul.u32 %s36, 2
      %s214 = ssub.s32 1, %s213
      %s215 = smul.u32 %s40, %s214
      %s216 = sadd.s32 %s36, %s215
      %s217 = ssub.s32 %s28, %s40
      %s218 = ssub.s32 %s212, %s216
      %s219 = sor.u32 %s217, %s218
      %p220 = scmp.eq.s32.totalorder %s219, 0
      %s222 = sadd.s32 %s221, 1
      %s223 = scalar_select %p220, %s221, %s222
      %p226 = pneg %p220
      %p227 = scmp.eq.s32.totalorder %s21, 3
      %p228 = por %p226, %p227
      %p229 = scmp.ne.s32.totalorder %s221, %s224
      %p230 = scmp.eq.s32.totalorder %s21, 0
      %p231 = por %p229, %p230
      %p232 = scmp.ne.s32.totalorder %s221, %s224
      %p233 = scmp.eq.s32.totalorder %s26, 3
      %p234 = por %p232, %p233
      %p235 = scmp.ne.s32.totalorder %s224, %s225
      %p236 = scmp.eq.s32.totalorder %s26, 0
      %p237 = por %p235, %p236
      %p238 = scmp.ne.s32.totalorder %s224, %s225
      %p239 = scmp.eq.s32.totalorder %s27, 3
      %p240 = por %p238, %p239
      %p242 = scmp.ne.s32.totalorder %s225, %s241
      %p243 = scmp.eq.s32.totalorder %s27, 0
      %p244 = por %p242, %p243
      %p245 = scmp.le.s32.totalorder 1, %s21
      %p246 = scmp.lt.s32.totalorder %s21, 5
      %p247 = pnand %p245, %p246
      %p248 = pneg %p247
      // Predicated region
      $region9: #{tpu_custom_call.1} parent=5 // pred_check
        _
      $region10: #{tpu_custom_call.1} parent=5 // pred_check_branch
        %250 = sbr.rel (%p247) target = $region12
      $region11: #{tpu_custom_call.1} parent=5 // pred_region
        %s251 = ssub.s32 %s21, 1
      $region12: #{tpu_custom_call.1} parent=5 // pred_fallthru
        _
      %p252 = scmp.lt.s32.totalorder %s21, 4
      // Predicated region
      $region13: #{tpu_custom_call.1} parent=5 // pred_check
        %p253 = pneg %p252
      $region14: #{tpu_custom_call.1} parent=5 // pred_check_branch
        %255 = sbr.rel (%p253) target = $region16
      $region15: #{tpu_custom_call.1} parent=5 // pred_region
        // Predicated region
        $region17: #{tpu_custom_call.1} parent=15 // pred_check
          %p256 = pneg %p63
        $region18: #{tpu_custom_call.1} parent=15 // pred_check_branch
          %258 = sbr.rel (%p256) target = $region20
        $region19: #{tpu_custom_call.1} parent=15 // pred_region
          %s259 = sand.u32 %s53, 1
          %s260 = scalar_lea.sflag [#allocation5], %s259
          %s261 = sand.u32 %s53, 1
          %s262 = smul.addr %s261, 32
          %s263 = scalar_lea.vmem [#allocation4], %s262
          %s264 = smul.u32 %s29, 2
          %s265 = ssub.s32 1, %s264
          %s266 = smul.u32 %s28, %s265
          %s267 = sadd.s32 %s29, %s266
          %s268 = smul.u32 4, %s267
          %s270 = ssub.s32 512, 512
          %271 = vsyncadd %s260, %s270
          %s272 = smul.addr %s28, 8
          %s273 = sadd.s32 %s268, %s272
          %s274 = smul.addr %s273, 128
          %s275 = scalar_lea.hbm %s0, %s274
          %s276 = sshll.u32 %s263, 4
          %s277 = int_to_ptr.vmem [resolvable:$true] %s276
          %282 = dma.hbm_to_vmem [thread:$0]  %s275, 512, %s277, %s260, 128, 128, 8
        $region20: #{tpu_custom_call.1} parent=15 // pred_fallthru
          _
        // Predicated region
        $region21: #{tpu_custom_call.1} parent=15 // pred_check
          %p283 = pneg %p97
        $region22: #{tpu_custom_call.1} parent=15 // pred_check_branch
          %285 = sbr.rel (%p283) target = $region24
        $region23: #{tpu_custom_call.1} parent=15 // pred_region
          %s286 = smul.u32 %s29, 2
          %s287 = ssub.s32 1, %s286
          %s288 = smul.u32 %s28, %s287
          %s289 = sadd.s32 %s29, %s288
          %s290 = smul.u32 4, %s289
          %p291 = scmp.lt.s32.totalorder %s290, 7
          %s292 = scalar_select %p291, %s290, 7
          %s293 = smul.addr %s292, 8
          %s294 = scalar_lea.vmem %s1, %s293
          %s295 = smul.u32 %s29, 2
          %s296 = ssub.s32 1, %s295
          %s297 = smul.u32 %s28, %s296
          %s298 = sadd.s32 %s29, %s297
          %s299 = smul.u32 4, %s298
        $region24: #{tpu_custom_call.1} parent=15 // pred_fallthru
          _
        // Predicated region
        $region25: #{tpu_custom_call.1} parent=15 // pred_check
          %p300 = pneg %p123
        $region26: #{tpu_custom_call.1} parent=15 // pred_check_branch
          %302 = sbr.rel (%p300) target = $region28
        $region27: #{tpu_custom_call.1} parent=15 // pred_region
          %p303 = scmp.lt.s32.totalorder %s28, 1
          %s304 = scalar_select %p303, %s28, 1
          %s305 = smul.addr %s304, 2
          %s306 = smul.addr %s305, 8
          %s307 = scalar_lea.vmem %s2, %s306
        $region28: #{tpu_custom_call.1} parent=15 // pred_fallthru
          _
      $region16: #{tpu_custom_call.1} parent=5 // pred_fallthru
        _
      %p308 = scmp.le.s32.totalorder 1, %s21
      %p309 = scmp.lt.s32.totalorder %s21, 5
      %p310 = pnand %p308, %p309
      %p311 = pneg %p310
      // Predicated region
      $region29: #{tpu_custom_call.1} parent=5 // pred_check
        _
      $region30: #{tpu_custom_call.1} parent=5 // pred_check_branch
        %313 = sbr.rel (%p310) target = $region32
      $region31: #{tpu_custom_call.1} parent=5 // pred_region
        %s314 = ssub.s32 %s21, 1
        %s315 = sand.u32 %s56, 1
        %s316 = scalar_lea.sflag [#allocation5], %s315
        %s317 = sand.u32 %s56, 1
        %s318 = smul.addr %s317, 32
        %s319 = scalar_lea.vmem [#allocation4], %s318
        // Predicated region
        $region33: #{tpu_custom_call.1} parent=31 // pred_check
          %p320 = pneg %p69
        $region34: #{tpu_custom_call.1} parent=31 // pred_check_branch
          %322 = sbr.rel (%p320) target = $region36
        $region35: #{tpu_custom_call.1} parent=31 // pred_region
          %323 = dma.done %s316, 512
        $region36: #{tpu_custom_call.1} parent=31 // pred_fallthru
          _
        %s324 = sand.u32 %s56, 1
        %s325 = scalar_lea.sflag [#allocation5], %s324
        %s326 = sand.u32 %s56, 1
        %s327 = smul.addr %s326, 32
        %s328 = scalar_lea.vmem [#allocation4], %s327
        %p329 = pneg %p69
        %p330 = pneg %p66
        %s331 = smul.u32 %s31, 2
        %s332 = ssub.s32 1, %s331
        %s333 = smul.u32 %s30, %s332
        %s334 = sadd.s32 %s31, %s333
        %s335 = smul.u32 4, %s334
        %p336 = scmp.lt.s32.totalorder %s335, 7
        %s337 = scalar_select %p336, %s335, 7
        %s338 = smul.addr %s337, 8
        %s339 = scalar_lea.vmem %s1, %s338
        %p340 = pneg %p103
        %p341 = pneg %p100
        %p342 = scmp.lt.s32.totalorder %s30, 1
        %s343 = scalar_select %p342, %s30, 1
        %s344 = smul.addr %s343, 2
        %s345 = smul.addr %s344, 8
        %s346 = scalar_lea.vmem %s2, %s345
        %p347 = pneg %p129
        %p348 = pneg %p126
        %p349 = pneg %p165
        %p350 = pneg %p162
        %s351 = sand.u32 %s152, 1
        %s352 = scalar_lea.sflag [#allocation6], %s351
        %s353 = sand.u32 %s152, 1
        %s354 = smul.addr %s353, 32
        %s355 = scalar_lea.vmem [#allocation7], %s354
        %p356 = pneg %p201
        %p357 = pneg %p198
        %s358 = sand.u32 %s188, 1
        %s359 = scalar_lea.sflag [#allocation9], %s358
        %s360 = sand.u32 %s188, 1
        %s361 = smul.addr %s360, 32
        %s362 = scalar_lea.vmem [#allocation8], %s361
        %p363 = pneg %p237
        %p364 = pneg %p234
        %s365 = smul.u32 %s31, 2
        %s366 = ssub.s32 1, %s365
        %s367 = smul.u32 %s30, %s366
        %s368 = sadd.s32 %s31, %s367
        %s369 = smul.u32 4, %s368
        %p370 = scmp.lt.s32.totalorder %s30, 1
        %s371 = scalar_select %p370, %s30, 1
        %p372 = scmp.lt.s32.totalorder %s369, 7
        %s373 = scalar_select %p372, %s369, 7
        %s374 = smul.addr %s371, 8
        %s375 = sadd.s32 %s373, %s374
        %s376 = smul.addr %s375, 8
        %s377 = scalar_lea.vmem %s5, %s376
        %s378 = smul.u32 %s31, 2
        %s379 = ssub.s32 1, %s378
        %s380 = smul.u32 %s30, %s379
        %s381 = sadd.s32 %s31, %s380
        %s382 = smul.u32 4, %s381
        %s383 = smul.u32 %s31, 2
        %s384 = ssub.s32 1, %s383
        %s385 = smul.u32 %s30, %s384
        %s386 = sadd.s32 %s31, %s385
        %s387 = smul.u32 4, %s386
        %p388 = scmp.lt.s32.totalorder %s387, 7
        %s389 = scalar_select %p388, %s387, 7
        %s390 = smul.addr %s389, 8
        %s391 = scalar_lea.vmem %s1, %s390
        %s392 = smul.u32 %s31, 2
        %s393 = ssub.s32 1, %s392
        %s394 = smul.u32 %s30, %s393
        %s395 = sadd.s32 %s31, %s394
        %s396 = smul.u32 4, %s395
        %p397 = scmp.lt.s32.totalorder %s30, 1
        %s398 = scalar_select %p397, %s30, 1
        %s399 = smul.addr %s398, 2
        %s400 = smul.addr %s399, 8
        %s401 = scalar_lea.vmem %s2, %s400
        %s402 = smul.u32 %s31, 2
        %s403 = ssub.s32 1, %s402
        %s404 = smul.u32 %s30, %s403
        %s405 = sadd.s32 %s31, %s404
        %s406 = smul.u32 4, %s405
        %s407 = smul.u32 %s31, 2
        %s408 = ssub.s32 1, %s407
        %s409 = smul.u32 %s30, %s408
        %s410 = sadd.s32 %s31, %s409
        %s411 = smul.u32 4, %s410
        %s412 = smul.u32 %s31, 2
        %s413 = ssub.s32 1, %s412
        %s414 = smul.u32 %s30, %s413
        %s415 = sadd.s32 %s31, %s414
        %s416 = smul.u32 4, %s415
        %p417 = scmp.lt.s32.totalorder %s30, 1
        %s418 = scalar_select %p417, %s30, 1
        %p419 = scmp.lt.s32.totalorder %s416, 7
        %s420 = scalar_select %p419, %s416, 7
        %s421 = smul.addr %s418, 8
        %s422 = sadd.s32 %s420, %s421
        %s423 = smul.addr %s422, 8
        %s424 = scalar_lea.vmem %s5, %s423
        %s425 = smul.u32 %s31, 2
        %s426 = ssub.s32 1, %s425
        %s427 = smul.u32 %s30, %s426
        %s428 = sadd.s32 %s31, %s427
        %s429 = smul.u32 4, %s428
        %p430 = scmp.eq.s32.totalorder %s31, 0
        // Predicated region
        $region37: #{tpu_custom_call.1} parent=31 // pred_check
          %p431 = pneg %p430
        $region38: #{tpu_custom_call.1} parent=31 // pred_check_branch
          %433 = sbr.rel (%p431) target = $region40
        $region39: #{tpu_custom_call.1} parent=31 // pred_region
          %s434 = smul.u32 %s30, 8
          %s435 = scalar_lea.vmem [#allocation2], %s434
          %vm436 = vcmask 130048
          %437 = vst.msk [vmem:[%s435] sm:$0xff] %vm436, 0.0
          %s438 = scalar_lea.vmem [#allocation3], %s434
          %439 = vst.msk [vmem:[%s438] sm:$0xff] %vm436, 0.0
        $region40: #{tpu_custom_call.1} parent=31 // pred_fallthru
          _
        %v440 = vld [vmem:[%s401] sm:$0xff]
        %v441 = vld [vmem:[%s401 + $0x8] sm:$0xff]
        %s442 = smul.u32 %s30, 8
        %s443 = scalar_lea.vmem [#allocation2], %s442
        %v444 = vld [vmem:[%s443] sm:$0xff]
        %s445 = scalar_lea.vmem [#allocation3], %s442
        %v446 = vld [vmem:[%s445] sm:$0xff]
        %s447 = smul.u32 %s30, 3
        %s448 = smul.u32 %s447, 8
        %s449 = scalar_lea.vmem %s319, %s448 [#allocation4]
        %v450 = vld [vmem:[%s449] sm:$0xff]
        %s451 = scalar_lea.vmem %s391, %s448
        %v452 = vld [vmem:[%s451] sm:$0xff]
        %vm453 = vcmask 130048
        %v455 = vsel %vm453, %v444, 0
        %457 = vmatprep.subr.mxu0 0.0
        %458 = vmatpush1.msra.mxu0 %v440
        %459 = vmatprep.subr.mxu0 0.0
        %460 = vmatpush1.msra.mxu0 %v441
        %461 = vmatprep.subr.mxu0 0.0
        %462 = vmatpush1.msra.mxu0 0.0
        %463 = vmatprep.subr.mxu0 0.0
        %464 = vmatpush1.msra.mxu0 0.0
        %465 = vmatprep.subr.mxu0 0.0
        %466 = vmatpush1.msra.mxu0 0.0
        %467 = vmatprep.subr.mxu0 0.0
        %468 = vmatpush1.msra.mxu0 0.0
        %469 = vmatprep.subr.mxu0 0.0
        %470 = vmatpush1.msra.mxu0 0.0
        %471 = vmatprep.subr.mxu0 0.0
        %472 = vmatpush1.msra.mxu0 0.0
        %473 = vmatprep.subr.mxu0 0.0
        %474 = vmatpush1.msra.mxu0 0.0
        %475 = vmatprep.subr.mxu0 0.0
        %476 = vmatpush1.msra.mxu0 0.0
        %477 = vmatprep.subr.mxu0 0.0
        %478 = vmatpush1.msra.mxu0 0.0
        %479 = vmatprep.subr.mxu0 0.0
        %480 = vmatpush1.msra.mxu0 0.0
        %481 = vmatprep.subr.mxu0 0.0
        %482 = vmatpush1.msra.mxu0 0.0
        %483 = vmatprep.subr.mxu0 0.0
        %484 = vmatpush1.msra.mxu0 0.0
        %485 = vmatprep.subr.mxu0 0.0
        %486 = vmatpush1.msra.mxu0 0.0
        %487 = vmatprep.subr.mxu0 0.0
        %488 = vmatpush1.msra.mxu0 0.0
        %489 = vmatprep.subr.mxu0 0.0
        %490 = vmatpush1.msra.mxu0 0.0
        %491 = vmatprep.subr.mxu0 0.0
        %492 = vmatpush1.msra.mxu0 0.0
        %493 = vmatprep.subr.mxu0 0.0
        %494 = vmatpush1.msra.mxu0 0.0
        %495 = vmatprep.subr.mxu0 0.0
        %496 = vmatpush1.msra.mxu0 0.0
        %497 = vmatprep.subr.mxu0 0.0
        %498 = vmatpush1.msra.mxu0 0.0
        %499 = vmatprep.subr.mxu0 0.0
        %500 = vmatpush1.msra.mxu0 0.0
        %501 = vmatprep.subr.mxu0 0.0
        %502 = vmatpush1.msra.mxu0 0.0
        %503 = vmatprep.subr.mxu0 0.0
        %504 = vmatpush1.msra.mxu0 0.0
        %505 = vmatprep.subr.mxu0 0.0
        %506 = vmatpush1.msra.mxu0 0.0
        %507 = vmatprep.subr.mxu0 0.0
        %508 = vmatpush1.msra.mxu0 0.0
        %509 = vmatprep.subr.mxu0 0.0
        %510 = vmatpush1.msra.mxu0 0.0
        %511 = vmatprep.subr.mxu0 0.0
        %512 = vmatpush1.msra.mxu0 0.0
        %513 = vmatprep.subr.mxu0 0.0
        %514 = vmatpush1.msra.mxu0 0.0
        %515 = vmatprep.subr.mxu0 0.0
        %516 = vmatpush1.msra.mxu0 0.0
        %517 = vmatprep.subr.mxu0 0.0
        %518 = vmatpush1.msra.mxu0 0.0
        %519 = vmatprep.subr.mxu0 0.0
        %520 = vmatpush1.msra.mxu0 0.0
        %521 = vmatprep.mubr.f32.mxu0 0.0
        %522 = vmatmul.mubr.f32.gmra.mrb[0].mxu0 %v455
        %v523 = vpop.f32.mrb[0].mxu0
        %v524 = vadd.f32 0.0, %v523
        %v525 = vpop.f32.mrb[0].mxu0
        %526 = vdwg.mxu0
        %v527 = vadd.f32 %v450, %v524
        %v528 = vxor.u32 %v527, 2147483648
        %v529 = vmul.f32 %v528, 1.442695
        %v530 = vpow.pop %v529
        %v531 = vadd.f32 %v530, 1.0
        %v532 = vrcp.pop %v531
        %v533 = vmul.f32 1.0, %v532
        %v534 = vsub.f32 1.0, %v533
        %v535 = vtanh.pop %v527
        %v536 = vmul.f32 %v534, %v446
        %538 = vrot.lane.b32.xlu0 %v535, 32
        %v539 = vpop.permute.xlu0 %538
        %v541 = vmul.f32 %v536, %v539
        %v542 = vsel %vm453, %v541, 0.0
        %543 = vadd.xlane.f32.xlu0 %v542
        %v544 = vpop.xlane.xlu0 %543
        %v545 = vmul.f32 %v533, %v539
        %546 = vrot.lane.b32.xlu0 %v535, 96
        %v547 = vpop.permute.xlu0 %546
        %v549 = vmul.f32 %v545, %v547
        %v550 = vsel %vm453, %v549, 0.0
        %551 = vadd.xlane.f32.xlu0 %v550
        %v552 = vpop.xlane.xlu0 %551
        %v553 = vadd.f32 %v544, %v552
        %554 = vrot.lane.b32.xlu0 %v535, 80
        %v555 = vpop.permute.xlu0 %554
        %v557 = vmul.f32 %v545, %v555
        %v558 = vsel %vm453, %v557, 0.0
        %559 = vadd.xlane.f32.xlu0 %v558
        %v560 = vpop.xlane.xlu0 %559
        %v561 = vadd.f32 %v544, %v560
        %562 = vrot.lane.b32.xlu0 %v535, 64
        %v563 = vpop.permute.xlu0 %562
        %v565 = vmul.f32 %v545, %v563
        %v566 = vsel %vm453, %v565, 0.0
        %567 = vadd.xlane.f32.xlu0 %v566
        %v568 = vpop.xlane.xlu0 %567
        %v569 = vadd.f32 %v544, %v568
        %570 = vrot.lane.b32.xlu0 %v535, 48
        %v571 = vpop.permute.xlu0 %570
        %v573 = vmul.f32 %v545, %v571
        %v574 = vsel %vm453, %v573, 0.0
        %575 = vadd.xlane.f32.xlu0 %v574
        %v576 = vpop.xlane.xlu0 %575
        %v577 = vadd.f32 %v544, %v576
        %vm578 = vcmask 7168
        %v579 = vsel %vm578, %v553, %v561
        %vm580 = vcmask 15360
        %v581 = vsel %vm580, %v579, %v569
        %vm582 = vcmask 23552
        %v583 = vsel %vm582, %v581, %v577
        %vm584 = vcmask 31744
        %v585 = vsel %vm584, %v583, -inf
        %586 = vmax.xlane.f32.xlu0 %v585
        %v587 = vpop.xlane.xlu0 %586
        %v588 = vsub.f32 %v583, %v587
        %v589 = vmul.f32 %v588, 1.442695
        %v590 = vpow.pop %v589
        %v591 = vsel %vm584, %v590, 0.0
        %592 = vadd.xlane.f32.xlu0 %v591
        %v593 = vpop.xlane.xlu0 %592
        %v594 = vrcp.pop %v593
        %v595 = vmul.f32 %v593, %v594
        %v596 = vsub.f32 2.0, %v595
        %v597 = vmul.f32 %v594, %v596
        %v598 = vmul.f32 %v590, %v597
        %600 = vset.pattern.permute.xlu0 0
        %601 = vperm.xlu0 %600, %v598
        %v602 = vpop.permute.xlu0 %601
        %v604 = vmul.f32 %v602, %v535
        %605 = vset.pattern.permute.xlu0 1
        %606 = vperm.xlu0 %605, %v598
        %v607 = vpop.permute.xlu0 %606
        %v609 = vmul.f32 %v607, %v535
        %611 = vrot.lane.b32.xlu0 %v609, 112
        %v612 = vpop.permute.xlu0 %611
        %v614 = vadd.f32 %v604, %v612
        %615 = vset.pattern.permute.xlu0 2
        %616 = vperm.xlu0 %615, %v598
        %v617 = vpop.permute.xlu0 %616
        %v619 = vmul.f32 %v617, %v535
        %621 = vrot.lane.b32.xlu0 %v619, 96
        %v622 = vpop.permute.xlu0 %621
        %v624 = vadd.f32 %v614, %v622
        %625 = vset.pattern.permute.xlu0 3
        %626 = vperm.xlu0 %625, %v598
        %v627 = vpop.permute.xlu0 %626
        %v629 = vmul.f32 %v627, %v535
        %631 = vrot.lane.b32.xlu0 %v629, 80
        %v632 = vpop.permute.xlu0 %631
        %v634 = vadd.f32 %v624, %v632
        %636 = vrot.lane.b32.xlu0 %v634, 96
        %v637 = vpop.permute.xlu0 %636
        %v639 = vmul.f32 %v533, %v637
        %v640 = vadd.f32 %v536, %v639
        %v641 = vtanh.pop %v640
        %643 = vrot.lane.b32.xlu0 %v641, 16
        %v644 = vpop.permute.xlu0 %643
        %v646 = vmul.f32 %v533, %v644
        %648 = vset.pattern.permute.xlu0 0
        %649 = vperm.xlu0 %648, %v452
        %v650 = vpop.permute.xlu0 %649
        %v652 = vmul.f32 %v650, %v646
        %v653 = vsub.f32 1.0, %v452
        %655 = vset.pattern.permute.xlu0 0
        %656 = vperm.xlu0 %655, %v653
        %v657 = vpop.permute.xlu0 %656
        %v659 = vmul.f32 %v657, %v444
        %661 = vrot.lane.b32.xlu0 %v659, 16
        %v662 = vpop.permute.xlu0 %661
        %v664 = vadd.f32 %v652, %v662
        %v665 = vmul.f32 %v650, %v640
        %v666 = vmul.f32 %v657, %v446
        %v667 = vadd.f32 %v665, %v666
        %669 = vrot.lane.b32.xlu0 %v664, 112
        %v670 = vpop.permute.xlu0 %669
        %s672 = scalar_lea.vmem %s355, %s448 [#allocation7]
        %673 = vst.msk [vmem:[%s672] sm:$0xff] %vm453, %v670
        %s674 = scalar_lea.vmem %s362, %s448 [#allocation8]
        %675 = vst.msk [vmem:[%s674] sm:$0xff] %vm453, %v667
        %s676 = scalar_lea.vmem %s424, %s448
        %677 = vst.msk [vmem:[%s676] sm:$0xff] %vm584, %v598
        %s678 = sadd.s32 %s30, 1
        %s679 = smul.u32 %s678, 8
        %s680 = scalar_lea.vmem %s319, %s679 [#allocation4]
        %v681 = vld [vmem:[%s680] sm:$0xff]
        %s682 = scalar_lea.vmem %s391, %s679
        %v683 = vld [vmem:[%s682] sm:$0xff]
        %v684 = vsel %vm453, %v670, 0
        %686 = vmatprep.subr.mxu0 0.0
        %687 = vmatpush1.msra.mxu0 %v440
        %688 = vmatprep.subr.mxu0 0.0
        %689 = vmatpush1.msra.mxu0 %v441
        %690 = vmatprep.subr.mxu0 0.0
        %691 = vmatpush1.msra.mxu0 0.0
        %692 = vmatprep.subr.mxu0 0.0
        %693 = vmatpush1.msra.mxu0 0.0
        %694 = vmatprep.subr.mxu0 0.0
        %695 = vmatpush1.msra.mxu0 0.0
        %696 = vmatprep.subr.mxu0 0.0
        %697 = vmatpush1.msra.mxu0 0.0
        %698 = vmatprep.subr.mxu0 0.0
        %699 = vmatpush1.msra.mxu0 0.0
        %700 = vmatprep.subr.mxu0 0.0
        %701 = vmatpush1.msra.mxu0 0.0
        %702 = vmatprep.subr.mxu0 0.0
        %703 = vmatpush1.msra.mxu0 0.0
        %704 = vmatprep.subr.mxu0 0.0
        %705 = vmatpush1.msra.mxu0 0.0
        %706 = vmatprep.subr.mxu0 0.0
        %707 = vmatpush1.msra.mxu0 0.0
        %708 = vmatprep.subr.mxu0 0.0
        %709 = vmatpush1.msra.mxu0 0.0
        %710 = vmatprep.subr.mxu0 0.0
        %711 = vmatpush1.msra.mxu0 0.0
        %712 = vmatprep.subr.mxu0 0.0
        %713 = vmatpush1.msra.mxu0 0.0
        %714 = vmatprep.subr.mxu0 0.0
        %715 = vmatpush1.msra.mxu0 0.0
        %716 = vmatprep.subr.mxu0 0.0
        %717 = vmatpush1.msra.mxu0 0.0
        %718 = vmatprep.subr.mxu0 0.0
        %719 = vmatpush1.msra.mxu0 0.0
        %720 = vmatprep.subr.mxu0 0.0
        %721 = vmatpush1.msra.mxu0 0.0
        %722 = vmatprep.subr.mxu0 0.0
        %723 = vmatpush1.msra.mxu0 0.0
        %724 = vmatprep.subr.mxu0 0.0
        %725 = vmatpush1.msra.mxu0 0.0
        %726 = vmatprep.subr.mxu0 0.0
        %727 = vmatpush1.msra.mxu0 0.0
        %728 = vmatprep.subr.mxu0 0.0
        %729 = vmatpush1.msra.mxu0 0.0
        %730 = vmatprep.subr.mxu0 0.0
        %731 = vmatpush1.msra.mxu0 0.0
        %732 = vmatprep.subr.mxu0 0.0
        %733 = vmatpush1.msra.mxu0 0.0
        %734 = vmatprep.subr.mxu0 0.0
        %735 = vmatpush1.msra.mxu0 0.0
        %736 = vmatprep.subr.mxu0 0.0
        %737 = vmatpush1.msra.mxu0 0.0
        %738 = vmatprep.subr.mxu0 0.0
        %739 = vmatpush1.msra.mxu0 0.0
        %740 = vmatprep.subr.mxu0 0.0
        %741 = vmatpush1.msra.mxu0 0.0
        %742 = vmatprep.subr.mxu0 0.0
        %743 = vmatpush1.msra.mxu0 0.0
        %744 = vmatprep.subr.mxu0 0.0
        %745 = vmatpush1.msra.mxu0 0.0
        %746 = vmatprep.subr.mxu0 0.0
        %747 = vmatpush1.msra.mxu0 0.0
        %748 = vmatprep.subr.mxu0 0.0
        %749 = vmatpush1.msra.mxu0 0.0
        %750 = vmatprep.mubr.f32.mxu0 0.0
        %751 = vmatmul.mubr.f32.gmra.mrb[0].mxu0 %v684
        %v752 = vpop.f32.mrb[0].mxu0
        %v753 = vadd.f32 0.0, %v752
        %v754 = vpop.f32.mrb[0].mxu0
        %755 = vdwg.mxu0
        %v756 = vadd.f32 %v681, %v753
        %v757 = vxor.u32 %v756, 2147483648
        %v758 = vmul.f32 %v757, 1.442695
        %v759 = vpow.pop %v758
        %v760 = vadd.f32 %v759, 1.0
        %v761 = vrcp.pop %v760
        %v762 = vmul.f32 1.0, %v761
        %v763 = vsub.f32 1.0, %v762
        %v764 = vtanh.pop %v756
        %v765 = vmul.f32 %v763, %v667
        %767 = vrot.lane.b32.xlu0 %v764, 32
        %v768 = vpop.permute.xlu0 %767
        %v770 = vmul.f32 %v765, %v768
        %v771 = vsel %vm453, %v770, 0.0
        %772 = vadd.xlane.f32.xlu0 %v771
        %v773 = vpop.xlane.xlu0 %772
        %v774 = vmul.f32 %v762, %v768
        %775 = vrot.lane.b32.xlu0 %v764, 96
        %v776 = vpop.permute.xlu0 %775
        %v778 = vmul.f32 %v774, %v776
        %v779 = vsel %vm453, %v778, 0.0
        %780 = vadd.xlane.f32.xlu0 %v779
        %v781 = vpop.xlane.xlu0 %780
        %v782 = vadd.f32 %v773, %v781
        %783 = vrot.lane.b32.xlu0 %v764, 80
        %v784 = vpop.permute.xlu0 %783
        %v786 = vmul.f32 %v774, %v784
        %v787 = vsel %vm453, %v786, 0.0
        %788 = vadd.xlane.f32.xlu0 %v787
        %v789 = vpop.xlane.xlu0 %788
        %v790 = vadd.f32 %v773, %v789
        %791 = vrot.lane.b32.xlu0 %v764, 64
        %v792 = vpop.permute.xlu0 %791
        %v794 = vmul.f32 %v774, %v792
        %v795 = vsel %vm453, %v794, 0.0
        %796 = vadd.xlane.f32.xlu0 %v795
        %v797 = vpop.xlane.xlu0 %796
        %v798 = vadd.f32 %v773, %v797
        %799 = vrot.lane.b32.xlu0 %v764, 48
        %v800 = vpop.permute.xlu0 %799
        %v802 = vmul.f32 %v774, %v800
        %v803 = vsel %vm453, %v802, 0.0
        %804 = vadd.xlane.f32.xlu0 %v803
        %v805 = vpop.xlane.xlu0 %804
        %v806 = vadd.f32 %v773, %v805
        %v807 = vsel %vm578, %v782, %v790
        %v808 = vsel %vm580, %v807, %v798
        %v809 = vsel %vm582, %v808, %v806
        %v810 = vsel %vm584, %v809, -inf
        %811 = vmax.xlane.f32.xlu0 %v810
        %v812 = vpop.xlane.xlu0 %811
        %v813 = vsub.f32 %v809, %v812
        %v814 = vmul.f32 %v813, 1.442695
        %v815 = vpow.pop %v814
        %v816 = vsel %vm584, %v815, 0.0
        %817 = vadd.xlane.f32.xlu0 %v816
        %v818 = vpop.xlane.xlu0 %817
        %v819 = vrcp.pop %v818
        %v820 = vmul.f32 %v818, %v819
        %v821 = vsub.f32 2.0, %v820
        %v822 = vmul.f32 %v819, %v821
        %v823 = vmul.f32 %v815, %v822
        %825 = vset.pattern.permute.xlu0 0
        %826 = vperm.xlu0 %825, %v823
        %v827 = vpop.permute.xlu0 %826
        %v829 = vmul.f32 %v827, %v764
        %830 = vset.pattern.permute.xlu0 1
        %831 = vperm.xlu0 %830, %v823
        %v832 = vpop.permute.xlu0 %831
        %v834 = vmul.f32 %v832, %v764
        %836 = vrot.lane.b32.xlu0 %v834, 112
        %v837 = vpop.permute.xlu0 %836
        %v839 = vadd.f32 %v829, %v837
        %840 = vset.pattern.permute.xlu0 2
        %841 = vperm.xlu0 %840, %v823
        %v842 = vpop.permute.xlu0 %841
        %v844 = vmul.f32 %v842, %v764
        %846 = vrot.lane.b32.xlu0 %v844, 96
        %v847 = vpop.permute.xlu0 %846
        %v849 = vadd.f32 %v839, %v847
        %850 = vset.pattern.permute.xlu0 3
        %851 = vperm.xlu0 %850, %v823
        %v852 = vpop.permute.xlu0 %851
        %v854 = vmul.f32 %v852, %v764
        %856 = vrot.lane.b32.xlu0 %v854, 80
        %v857 = vpop.permute.xlu0 %856
        %v859 = vadd.f32 %v849, %v857
        %861 = vrot.lane.b32.xlu0 %v859, 96
        %v862 = vpop.permute.xlu0 %861
        %v864 = vmul.f32 %v762, %v862
        %v865 = vadd.f32 %v765, %v864
        %v866 = vtanh.pop %v865
        %868 = vrot.lane.b32.xlu0 %v866, 16
        %v869 = vpop.permute.xlu0 %868
        %v871 = vmul.f32 %v762, %v869
        %873 = vset.pattern.permute.xlu0 0
        %874 = vperm.xlu0 %873, %v683
        %v875 = vpop.permute.xlu0 %874
        %v877 = vmul.f32 %v875, %v871
        %v878 = vsub.f32 1.0, %v683
        %880 = vset.pattern.permute.xlu0 0
        %881 = vperm.xlu0 %880, %v878
        %v882 = vpop.permute.xlu0 %881
        %v884 = vmul.f32 %v882, %v664
        %v885 = vadd.f32 %v877, %v884
        %v886 = vmul.f32 %v875, %v865
        %v887 = vmul.f32 %v882, %v667
        %v888 = vadd.f32 %v886, %v887
        %890 = vrot.lane.b32.xlu0 %v885, 112
        %v891 = vpop.permute.xlu0 %890
        %s893 = scalar_lea.vmem %s355, %s679 [#allocation7]
        %894 = vst.msk [vmem:[%s893] sm:$0xff] %vm453, %v891
        %s895 = scalar_lea.vmem %s362, %s679 [#allocation8]
        %896 = vst.msk [vmem:[%s895] sm:$0xff] %vm453, %v888
        %s897 = scalar_lea.vmem %s424, %s679
        %898 = vst.msk [vmem:[%s897] sm:$0xff] %vm584, %v823
        %s899 = ssub.s32 2, %s30
        %s900 = smul.u32 %s899, 8
        %s901 = scalar_lea.vmem %s319, %s900 [#allocation4]
        %v902 = vld [vmem:[%s901] sm:$0xff]
        %s903 = scalar_lea.vmem %s391, %s900
        %v904 = vld [vmem:[%s903] sm:$0xff]
        %v905 = vsel %vm453, %v891, 0
        %907 = vmatprep.subr.mxu0 0.0
        %908 = vmatpush1.msra.mxu0 %v440
        %909 = vmatprep.subr.mxu0 0.0
        %910 = vmatpush1.msra.mxu0 %v441
        %911 = vmatprep.subr.mxu0 0.0
        %912 = vmatpush1.msra.mxu0 0.0
        %913 = vmatprep.subr.mxu0 0.0
        %914 = vmatpush1.msra.mxu0 0.0
        %915 = vmatprep.subr.mxu0 0.0
        %916 = vmatpush1.msra.mxu0 0.0
        %917 = vmatprep.subr.mxu0 0.0
        %918 = vmatpush1.msra.mxu0 0.0
        %919 = vmatprep.subr.mxu0 0.0
        %920 = vmatpush1.msra.mxu0 0.0
        %921 = vmatprep.subr.mxu0 0.0
        %922 = vmatpush1.msra.mxu0 0.0
        %923 = vmatprep.subr.mxu0 0.0
        %924 = vmatpush1.msra.mxu0 0.0
        %925 = vmatprep.subr.mxu0 0.0
        %926 = vmatpush1.msra.mxu0 0.0
        %927 = vmatprep.subr.mxu0 0.0
        %928 = vmatpush1.msra.mxu0 0.0
        %929 = vmatprep.subr.mxu0 0.0
        %930 = vmatpush1.msra.mxu0 0.0
        %931 = vmatprep.subr.mxu0 0.0
        %932 = vmatpush1.msra.mxu0 0.0
        %933 = vmatprep.subr.mxu0 0.0
        %934 = vmatpush1.msra.mxu0 0.0
        %935 = vmatprep.subr.mxu0 0.0
        %936 = vmatpush1.msra.mxu0 0.0
        %937 = vmatprep.subr.mxu0 0.0
        %938 = vmatpush1.msra.mxu0 0.0
        %939 = vmatprep.subr.mxu0 0.0
        %940 = vmatpush1.msra.mxu0 0.0
        %941 = vmatprep.subr.mxu0 0.0
        %942 = vmatpush1.msra.mxu0 0.0
        %943 = vmatprep.subr.mxu0 0.0
        %944 = vmatpush1.msra.mxu0 0.0
        %945 = vmatprep.subr.mxu0 0.0
        %946 = vmatpush1.msra.mxu0 0.0
        %947 = vmatprep.subr.mxu0 0.0
        %948 = vmatpush1.msra.mxu0 0.0
        %949 = vmatprep.subr.mxu0 0.0
        %950 = vmatpush1.msra.mxu0 0.0
        %951 = vmatprep.subr.mxu0 0.0
        %952 = vmatpush1.msra.mxu0 0.0
        %953 = vmatprep.subr.mxu0 0.0
        %954 = vmatpush1.msra.mxu0 0.0
        %955 = vmatprep.subr.mxu0 0.0
        %956 = vmatpush1.msra.mxu0 0.0
        %957 = vmatprep.subr.mxu0 0.0
        %958 = vmatpush1.msra.mxu0 0.0
        %959 = vmatprep.subr.mxu0 0.0
        %960 = vmatpush1.msra.mxu0 0.0
        %961 = vmatprep.subr.mxu0 0.0
        %962 = vmatpush1.msra.mxu0 0.0
        %963 = vmatprep.subr.mxu0 0.0
        %964 = vmatpush1.msra.mxu0 0.0
        %965 = vmatprep.subr.mxu0 0.0
        %966 = vmatpush1.msra.mxu0 0.0
        %967 = vmatprep.subr.mxu0 0.0
        %968 = vmatpush1.msra.mxu0 0.0
        %969 = vmatprep.subr.mxu0 0.0
        %970 = vmatpush1.msra.mxu0 0.0
        %971 = vmatprep.mubr.f32.mxu0 0.0
        %972 = vmatmul.mubr.f32.gmra.mrb[0].mxu0 %v905
        %v973 = vpop.f32.mrb[0].mxu0
        %v974 = vadd.f32 0.0, %v973
        %v975 = vpop.f32.mrb[0].mxu0
        %976 = vdwg.mxu0
        %v977 = vadd.f32 %v902, %v974
        %v978 = vxor.u32 %v977, 2147483648
        %v979 = vmul.f32 %v978, 1.442695
        %v980 = vpow.pop %v979
        %v981 = vadd.f32 %v980, 1.0
        %v982 = vrcp.pop %v981
        %v983 = vmul.f32 1.0, %v982
        %v984 = vsub.f32 1.0, %v983
        %v985 = vtanh.pop %v977
        %v986 = vmul.f32 %v984, %v888
        %988 = vrot.lane.b32.xlu0 %v985, 32
        %v989 = vpop.permute.xlu0 %988
        %v991 = vmul.f32 %v986, %v989
        %v992 = vsel %vm453, %v991, 0.0
        %993 = vadd.xlane.f32.xlu0 %v992
        %v994 = vpop.xlane.xlu0 %993
        %v995 = vmul.f32 %v983, %v989
        %996 = vrot.lane.b32.xlu0 %v985, 96
        %v997 = vpop.permute.xlu0 %996
        %v999 = vmul.f32 %v995, %v997
        %v1000 = vsel %vm453, %v999, 0.0
        %1001 = vadd.xlane.f32.xlu0 %v1000
        %v1002 = vpop.xlane.xlu0 %1001
        %v1003 = vadd.f32 %v994, %v1002
        %1004 = vrot.lane.b32.xlu0 %v985, 80
        %v1005 = vpop.permute.xlu0 %1004
        %v1007 = vmul.f32 %v995, %v1005
        %v1008 = vsel %vm453, %v1007, 0.0
        %1009 = vadd.xlane.f32.xlu0 %v1008
        %v1010 = vpop.xlane.xlu0 %1009
        %v1011 = vadd.f32 %v994, %v1010
        %1012 = vrot.lane.b32.xlu0 %v985, 64
        %v1013 = vpop.permute.xlu0 %1012
        %v1015 = vmul.f32 %v995, %v1013
        %v1016 = vsel %vm453, %v1015, 0.0
        %1017 = vadd.xlane.f32.xlu0 %v1016
        %v1018 = vpop.xlane.xlu0 %1017
        %v1019 = vadd.f32 %v994, %v1018
        %1020 = vrot.lane.b32.xlu0 %v985, 48
        %v1021 = vpop.permute.xlu0 %1020
        %v1023 = vmul.f32 %v995, %v1021
        %v1024 = vsel %vm453, %v1023, 0.0
        %1025 = vadd.xlane.f32.xlu0 %v1024
        %v1026 = vpop.xlane.xlu0 %1025
        %v1027 = vadd.f32 %v994, %v1026
        %v1028 = vsel %vm578, %v1003, %v1011
        %v1029 = vsel %vm580, %v1028, %v1019
        %v1030 = vsel %vm582, %v1029, %v1027
        %v1031 = vsel %vm584, %v1030, -inf
        %1032 = vmax.xlane.f32.xlu0 %v1031
        %v1033 = vpop.xlane.xlu0 %1032
        %v1034 = vsub.f32 %v1030, %v1033
        %v1035 = vmul.f32 %v1034, 1.442695
        %v1036 = vpow.pop %v1035
        %v1037 = vsel %vm584, %v1036, 0.0
        %1038 = vadd.xlane.f32.xlu0 %v1037
        %v1039 = vpop.xlane.xlu0 %1038
        %v1040 = vrcp.pop %v1039
        %v1041 = vmul.f32 %v1039, %v1040
        %v1042 = vsub.f32 2.0, %v1041
        %v1043 = vmul.f32 %v1040, %v1042
        %v1044 = vmul.f32 %v1036, %v1043
        %1046 = vset.pattern.permute.xlu0 0
        %1047 = vperm.xlu0 %1046, %v1044
        %v1048 = vpop.permute.xlu0 %1047
        %v1050 = vmul.f32 %v1048, %v985
        %1051 = vset.pattern.permute.xlu0 1
        %1052 = vperm.xlu0 %1051, %v1044
        %v1053 = vpop.permute.xlu0 %1052
        %v1055 = vmul.f32 %v1053, %v985
        %1057 = vrot.lane.b32.xlu0 %v1055, 112
        %v1058 = vpop.permute.xlu0 %1057
        %v1060 = vadd.f32 %v1050, %v1058
        %1061 = vset.pattern.permute.xlu0 2
        %1062 = vperm.xlu0 %1061, %v1044
        %v1063 = vpop.permute.xlu0 %1062
        %v1065 = vmul.f32 %v1063, %v985
        %1067 = vrot.lane.b32.xlu0 %v1065, 96
        %v1068 = vpop.permute.xlu0 %1067
        %v1070 = vadd.f32 %v1060, %v1068
        %1071 = vset.pattern.permute.xlu0 3
        %1072 = vperm.xlu0 %1071, %v1044
        %v1073 = vpop.permute.xlu0 %1072
        %v1075 = vmul.f32 %v1073, %v985
        %1077 = vrot.lane.b32.xlu0 %v1075, 80
        %v1078 = vpop.permute.xlu0 %1077
        %v1080 = vadd.f32 %v1070, %v1078
        %1082 = vrot.lane.b32.xlu0 %v1080, 96
        %v1083 = vpop.permute.xlu0 %1082
        %v1085 = vmul.f32 %v983, %v1083
        %v1086 = vadd.f32 %v986, %v1085
        %v1087 = vtanh.pop %v1086
        %1089 = vrot.lane.b32.xlu0 %v1087, 16
        %v1090 = vpop.permute.xlu0 %1089
        %v1092 = vmul.f32 %v983, %v1090
        %1094 = vset.pattern.permute.xlu0 0
        %1095 = vperm.xlu0 %1094, %v904
        %v1096 = vpop.permute.xlu0 %1095
        %v1098 = vmul.f32 %v1096, %v1092
        %v1099 = vsub.f32 1.0, %v904
        %1101 = vset.pattern.permute.xlu0 0
        %1102 = vperm.xlu0 %1101, %v1099
        %v1103 = vpop.permute.xlu0 %1102
        %v1105 = vmul.f32 %v1103, %v885
        %v1106 = vadd.f32 %v1098, %v1105
        %v1107 = vmul.f32 %v1096, %v1086
        %v1108 = vmul.f32 %v1103, %v888
        %v1109 = vadd.f32 %v1107, %v1108
        %1111 = vrot.lane.b32.xlu0 %v1106, 112
        %v1112 = vpop.permute.xlu0 %1111
        %s1114 = scalar_lea.vmem %s355, %s900 [#allocation7]
        %1115 = vst.msk [vmem:[%s1114] sm:$0xff] %vm453, %v1112
        %s1116 = scalar_lea.vmem %s362, %s900 [#allocation8]
        %1117 = vst.msk [vmem:[%s1116] sm:$0xff] %vm453, %v1109
        %s1118 = scalar_lea.vmem %s424, %s900
        %1119 = vst.msk [vmem:[%s1118] sm:$0xff] %vm584, %v1044
        %s1120 = smul.u32 %s30, 4294967293
        %s1121 = sadd.s32 %s1120, 3
        %s1122 = smul.u32 %s1121, 8
        %s1123 = scalar_lea.vmem %s319, %s1122 [#allocation4]
        %v1124 = vld [vmem:[%s1123] sm:$0xff]
        %s1125 = scalar_lea.vmem %s391, %s1122
        %v1126 = vld [vmem:[%s1125] sm:$0xff]
        %v1127 = vsel %vm453, %v1112, 0
        %1129 = vmatprep.subr.mxu0 0.0
        %1130 = vmatpush1.msra.mxu0 %v440
        %1131 = vmatprep.subr.mxu0 0.0
        %1132 = vmatpush1.msra.mxu0 %v441
        %1133 = vmatprep.subr.mxu0 0.0
        %1134 = vmatpush1.msra.mxu0 0.0
        %1135 = vmatprep.subr.mxu0 0.0
        %1136 = vmatpush1.msra.mxu0 0.0
        %1137 = vmatprep.subr.mxu0 0.0
        %1138 = vmatpush1.msra.mxu0 0.0
        %1139 = vmatprep.subr.mxu0 0.0
        %1140 = vmatpush1.msra.mxu0 0.0
        %1141 = vmatprep.subr.mxu0 0.0
        %1142 = vmatpush1.msra.mxu0 0.0
        %1143 = vmatprep.subr.mxu0 0.0
        %1144 = vmatpush1.msra.mxu0 0.0
        %1145 = vmatprep.subr.mxu0 0.0
        %1146 = vmatpush1.msra.mxu0 0.0
        %1147 = vmatprep.subr.mxu0 0.0
        %1148 = vmatpush1.msra.mxu0 0.0
        %1149 = vmatprep.subr.mxu0 0.0
        %1150 = vmatpush1.msra.mxu0 0.0
        %1151 = vmatprep.subr.mxu0 0.0
        %1152 = vmatpush1.msra.mxu0 0.0
        %1153 = vmatprep.subr.mxu0 0.0
        %1154 = vmatpush1.msra.mxu0 0.0
        %1155 = vmatprep.subr.mxu0 0.0
        %1156 = vmatpush1.msra.mxu0 0.0
        %1157 = vmatprep.subr.mxu0 0.0
        %1158 = vmatpush1.msra.mxu0 0.0
        %1159 = vmatprep.subr.mxu0 0.0
        %1160 = vmatpush1.msra.mxu0 0.0
        %1161 = vmatprep.subr.mxu0 0.0
        %1162 = vmatpush1.msra.mxu0 0.0
        %1163 = vmatprep.subr.mxu0 0.0
        %1164 = vmatpush1.msra.mxu0 0.0
        %1165 = vmatprep.subr.mxu0 0.0
        %1166 = vmatpush1.msra.mxu0 0.0
        %1167 = vmatprep.subr.mxu0 0.0
        %1168 = vmatpush1.msra.mxu0 0.0
        %1169 = vmatprep.subr.mxu0 0.0
        %1170 = vmatpush1.msra.mxu0 0.0
        %1171 = vmatprep.subr.mxu0 0.0
        %1172 = vmatpush1.msra.mxu0 0.0
        %1173 = vmatprep.subr.mxu0 0.0
        %1174 = vmatpush1.msra.mxu0 0.0
        %1175 = vmatprep.subr.mxu0 0.0
        %1176 = vmatpush1.msra.mxu0 0.0
        %1177 = vmatprep.subr.mxu0 0.0
        %1178 = vmatpush1.msra.mxu0 0.0
        %1179 = vmatprep.subr.mxu0 0.0
        %1180 = vmatpush1.msra.mxu0 0.0
        %1181 = vmatprep.subr.mxu0 0.0
        %1182 = vmatpush1.msra.mxu0 0.0
        %1183 = vmatprep.subr.mxu0 0.0
        %1184 = vmatpush1.msra.mxu0 0.0
        %1185 = vmatprep.subr.mxu0 0.0
        %1186 = vmatpush1.msra.mxu0 0.0
        %1187 = vmatprep.subr.mxu0 0.0
        %1188 = vmatpush1.msra.mxu0 0.0
        %1189 = vmatprep.subr.mxu0 0.0
        %1190 = vmatpush1.msra.mxu0 0.0
        %1191 = vmatprep.subr.mxu0 0.0
        %1192 = vmatpush1.msra.mxu0 0.0
        %1193 = vmatprep.mubr.f32.mxu0 0.0
        %1194 = vmatmul.mubr.f32.gmra.mrb[0].mxu0 %v1127
        %v1195 = vpop.f32.mrb[0].mxu0
        %v1196 = vadd.f32 0.0, %v1195
        %v1197 = vpop.f32.mrb[0].mxu0
        %1198 = vdwg.mxu0
        %v1199 = vadd.f32 %v1124, %v1196
        %v1200 = vxor.u32 %v1199, 2147483648
        %v1201 = vmul.f32 %v1200, 1.442695
        %v1202 = vpow.pop %v1201
        %v1203 = vadd.f32 %v1202, 1.0
        %v1204 = vrcp.pop %v1203
        %v1205 = vmul.f32 1.0, %v1204
        %v1206 = vsub.f32 1.0, %v1205
        %v1207 = vtanh.pop %v1199
        %v1208 = vmul.f32 %v1206, %v1109
        %1210 = vrot.lane.b32.xlu0 %v1207, 32
        %v1211 = vpop.permute.xlu0 %1210
        %v1213 = vmul.f32 %v1208, %v1211
        %v1214 = vsel %vm453, %v1213, 0.0
        %1215 = vadd.xlane.f32.xlu0 %v1214
        %v1216 = vpop.xlane.xlu0 %1215
        %v1217 = vmul.f32 %v1205, %v1211
        %1218 = vrot.lane.b32.xlu0 %v1207, 96
        %v1219 = vpop.permute.xlu0 %1218
        %v1221 = vmul.f32 %v1217, %v1219
        %v1222 = vsel %vm453, %v1221, 0.0
        %1223 = vadd.xlane.f32.xlu0 %v1222
        %v1224 = vpop.xlane.xlu0 %1223
        %v1225 = vadd.f32 %v1216, %v1224
        %1226 = vrot.lane.b32.xlu0 %v1207, 80
        %v1227 = vpop.permute.xlu0 %1226
        %v1229 = vmul.f32 %v1217, %v1227
        %v1230 = vsel %vm453, %v1229, 0.0
        %1231 = vadd.xlane.f32.xlu0 %v1230
        %v1232 = vpop.xlane.xlu0 %1231
        %v1233 = vadd.f32 %v1216, %v1232
        %1234 = vrot.lane.b32.xlu0 %v1207, 64
        %v1235 = vpop.permute.xlu0 %1234
        %v1237 = vmul.f32 %v1217, %v1235
        %v1238 = vsel %vm453, %v1237, 0.0
        %1239 = vadd.xlane.f32.xlu0 %v1238
        %v1240 = vpop.xlane.xlu0 %1239
        %v1241 = vadd.f32 %v1216, %v1240
        %1242 = vrot.lane.b32.xlu0 %v1207, 48
        %v1243 = vpop.permute.xlu0 %1242
        %v1245 = vmul.f32 %v1217, %v1243
        %v1246 = vsel %vm453, %v1245, 0.0
        %1247 = vadd.xlane.f32.xlu0 %v1246
        %v1248 = vpop.xlane.xlu0 %1247
        %v1249 = vadd.f32 %v1216, %v1248
        %v1250 = vsel %vm578, %v1225, %v1233
        %v1251 = vsel %vm580, %v1250, %v1241
        %v1252 = vsel %vm582, %v1251, %v1249
        %v1253 = vsel %vm584, %v1252, -inf
        %1254 = vmax.xlane.f32.xlu0 %v1253
        %v1255 = vpop.xlane.xlu0 %1254
        %v1256 = vsub.f32 %v1252, %v1255
        %v1257 = vmul.f32 %v1256, 1.442695
        %v1258 = vpow.pop %v1257
        %v1259 = vsel %vm584, %v1258, 0.0
        %1260 = vadd.xlane.f32.xlu0 %v1259
        %v1261 = vpop.xlane.xlu0 %1260
        %v1262 = vrcp.pop %v1261
        %v1263 = vmul.f32 %v1261, %v1262
        %v1264 = vsub.f32 2.0, %v1263
        %v1265 = vmul.f32 %v1262, %v1264
        %v1266 = vmul.f32 %v1258, %v1265
        %1268 = vset.pattern.permute.xlu0 0
        %1269 = vperm.xlu0 %1268, %v1266
        %v1270 = vpop.permute.xlu0 %1269
        %v1272 = vmul.f32 %v1270, %v1207
        %1273 = vset.pattern.permute.xlu0 1
        %1274 = vperm.xlu0 %1273, %v1266
        %v1275 = vpop.permute.xlu0 %1274
        %v1277 = vmul.f32 %v1275, %v1207
        %1279 = vrot.lane.b32.xlu0 %v1277, 112
        %v1280 = vpop.permute.xlu0 %1279
        %v1282 = vadd.f32 %v1272, %v1280
        %1283 = vset.pattern.permute.xlu0 2
        %1284 = vperm.xlu0 %1283, %v1266
        %v1285 = vpop.permute.xlu0 %1284
        %v1287 = vmul.f32 %v1285, %v1207
        %1289 = vrot.lane.b32.xlu0 %v1287, 96
        %v1290 = vpop.permute.xlu0 %1289
        %v1292 = vadd.f32 %v1282, %v1290
        %1293 = vset.pattern.permute.xlu0 3
        %1294 = vperm.xlu0 %1293, %v1266
        %v1295 = vpop.permute.xlu0 %1294
        %v1297 = vmul.f32 %v1295, %v1207
        %1299 = vrot.lane.b32.xlu0 %v1297, 80
        %v1300 = vpop.permute.xlu0 %1299
        %v1302 = vadd.f32 %v1292, %v1300
        %1304 = vrot.lane.b32.xlu0 %v1302, 96
        %v1305 = vpop.permute.xlu0 %1304
        %v1307 = vmul.f32 %v1205, %v1305
        %v1308 = vadd.f32 %v1208, %v1307
        %v1309 = vtanh.pop %v1308
        %1311 = vrot.lane.b32.xlu0 %v1309, 16
        %v1312 = vpop.permute.xlu0 %1311
        %v1314 = vmul.f32 %v1205, %v1312
        %1316 = vset.pattern.permute.xlu0 0
        %1317 = vperm.xlu0 %1316, %v1126
        %v1318 = vpop.permute.xlu0 %1317
        %v1320 = vmul.f32 %v1318, %v1314
        %v1321 = vsub.f32 1.0, %v1126
        %1323 = vset.pattern.permute.xlu0 0
        %1324 = vperm.xlu0 %1323, %v1321
        %v1325 = vpop.permute.xlu0 %1324
        %v1327 = vmul.f32 %v1325, %v1106
        %v1328 = vadd.f32 %v1320, %v1327
        %v1329 = vmul.f32 %v1318, %v1308
        %v1330 = vmul.f32 %v1325, %v1109
        %v1331 = vadd.f32 %v1329, %v1330
        %1333 = vrot.lane.b32.xlu0 %v1328, 112
        %v1334 = vpop.permute.xlu0 %1333
        %s1336 = scalar_lea.vmem %s355, %s1122 [#allocation7]
        %1337 = vst.msk [vmem:[%s1336] sm:$0xff] %vm453, %v1334
        %s1338 = scalar_lea.vmem %s362, %s1122 [#allocation8]
        %1339 = vst.msk [vmem:[%s1338] sm:$0xff] %vm453, %v1331
        %s1340 = scalar_lea.vmem %s424, %s1122
        %1341 = vst.msk [vmem:[%s1340] sm:$0xff] %vm584, %v1266
        %1342 = vst.msk [vmem:[%s443] sm:$0xff] %vm453, %v1334
        %1343 = vst.msk [vmem:[%s445] sm:$0xff] %vm453, %v1331
        %s1344 = sand.u32 %s152, 1
        %s1345 = scalar_lea.sflag [#allocation6], %s1344
        %s1346 = sand.u32 %s152, 1
        %s1347 = smul.addr %s1346, 32
        %s1348 = scalar_lea.vmem [#allocation7], %s1347
        %s1349 = sand.u32 %s188, 1
        %s1350 = scalar_lea.sflag [#allocation9], %s1349
        %s1351 = sand.u32 %s188, 1
        %s1352 = smul.addr %s1351, 32
        %s1353 = scalar_lea.vmem [#allocation8], %s1352
        %s1354 = smul.u32 %s31, 2
        %s1355 = ssub.s32 1, %s1354
        %s1356 = smul.u32 %s30, %s1355
        %s1357 = sadd.s32 %s31, %s1356
        %s1358 = smul.u32 4, %s1357
        %p1359 = scmp.lt.s32.totalorder %s30, 1
        %s1360 = scalar_select %p1359, %s30, 1
        %p1361 = scmp.lt.s32.totalorder %s1358, 7
        %s1362 = scalar_select %p1361, %s1358, 7
        %s1363 = smul.addr %s1360, 8
        %s1364 = sadd.s32 %s1362, %s1363
        %s1365 = smul.addr %s1364, 8
        %s1366 = scalar_lea.vmem %s5, %s1365
        // Predicated region
        $region41: #{tpu_custom_call.1} parent=31 // pred_check
          %p1367 = pneg %p162
        $region42: #{tpu_custom_call.1} parent=31 // pred_check_branch
          %1369 = sbr.rel (%p1367) target = $region44
        $region43: #{tpu_custom_call.1} parent=31 // pred_region
          %s1370 = smul.u32 %s31, 2
          %s1371 = ssub.s32 1, %s1370
          %s1372 = smul.u32 %s30, %s1371
          %s1373 = sadd.s32 %s31, %s1372
          %s1374 = smul.u32 4, %s1373
          %s1376 = ssub.s32 512, 512
          %1377 = vsyncadd %s1345, %s1376
          %s1378 = smul.addr %s30, 8
          %s1379 = sadd.s32 %s1374, %s1378
          %s1380 = smul.addr %s1379, 128
          %s1381 = scalar_lea.hbm %s3, %s1380
          %s1382 = sshll.u32 %s1348, 4
          %s1383 = int_to_ptr.vmem [resolvable:$true] %s1382
          %1388 = dma.vmem_to_hbm [thread:$0]  %s1383, 512, %s1381, %s1345, 128, 128, 8
        $region44: #{tpu_custom_call.1} parent=31 // pred_fallthru
          _
        // Predicated region
        $region45: #{tpu_custom_call.1} parent=31 // pred_check
          %p1389 = pneg %p198
        $region46: #{tpu_custom_call.1} parent=31 // pred_check_branch
          %1391 = sbr.rel (%p1389) target = $region48
        $region47: #{tpu_custom_call.1} parent=31 // pred_region
          %s1392 = smul.u32 %s31, 2
          %s1393 = ssub.s32 1, %s1392
          %s1394 = smul.u32 %s30, %s1393
          %s1395 = sadd.s32 %s31, %s1394
          %s1396 = smul.u32 4, %s1395
          %s1398 = ssub.s32 512, 512
          %1399 = vsyncadd %s1350, %s1398
          %s1400 = smul.addr %s30, 8
          %s1401 = sadd.s32 %s1396, %s1400
          %s1402 = smul.addr %s1401, 128
          %s1403 = scalar_lea.hbm %s4, %s1402
          %s1404 = sshll.u32 %s1353, 4
          %s1405 = int_to_ptr.vmem [resolvable:$true] %s1404
          %1410 = dma.vmem_to_hbm [thread:$0]  %s1405, 512, %s1403, %s1350, 128, 128, 8
        $region48: #{tpu_custom_call.1} parent=31 // pred_fallthru
          _
        // Predicated region
        $region49: #{tpu_custom_call.1} parent=31 // pred_check
          %p1411 = pneg %p234
        $region50: #{tpu_custom_call.1} parent=31 // pred_check_branch
          %1413 = sbr.rel (%p1411) target = $region52
        $region51: #{tpu_custom_call.1} parent=31 // pred_region
          %s1414 = smul.u32 %s31, 2
          %s1415 = ssub.s32 1, %s1414
          %s1416 = smul.u32 %s30, %s1415
          %s1417 = sadd.s32 %s31, %s1416
          %s1418 = smul.u32 4, %s1417
        $region52: #{tpu_custom_call.1} parent=31 // pred_fallthru
          _
      $region32: #{tpu_custom_call.1} parent=5 // pred_fallthru
        _
      %p1419 = scmp.le.s32.totalorder 2, %s21
      // Predicated region
      $region53: #{tpu_custom_call.1} parent=5 // pred_check
        %p1420 = pneg %p1419
      $region54: #{tpu_custom_call.1} parent=5 // pred_check_branch
        %1422 = sbr.rel (%p1420) target = $region56
      $region55: #{tpu_custom_call.1} parent=5 // pred_region
        %s1423 = ssub.s32 %s21, 2
        // Predicated region
        $region57: #{tpu_custom_call.1} parent=55 // pred_check
          %p1424 = pneg %p168
        $region58: #{tpu_custom_call.1} parent=55 // pred_check_branch
          %1426 = sbr.rel (%p1424) target = $region60
        $region59: #{tpu_custom_call.1} parent=55 // pred_region
          %s1427 = sand.u32 %s153, 1
          %s1428 = scalar_lea.sflag [#allocation6], %s1427
          %s1429 = sand.u32 %s153, 1
          %s1430 = smul.addr %s1429, 32
          %s1431 = scalar_lea.vmem [#allocation7], %s1430
          %1432 = dma.done %s1428, 512
        $region60: #{tpu_custom_call.1} parent=55 // pred_fallthru
          _
        // Predicated region
        $region61: #{tpu_custom_call.1} parent=55 // pred_check
          %p1433 = pneg %p204
        $region62: #{tpu_custom_call.1} parent=55 // pred_check_branch
          %1435 = sbr.rel (%p1433) target = $region64
        $region63: #{tpu_custom_call.1} parent=55 // pred_region
          %s1436 = sand.u32 %s189, 1
          %s1437 = scalar_lea.sflag [#allocation9], %s1436
          %s1438 = sand.u32 %s189, 1
          %s1439 = smul.addr %s1438, 32
          %s1440 = scalar_lea.vmem [#allocation8], %s1439
          %1441 = dma.done %s1437, 512
        $region64: #{tpu_custom_call.1} parent=55 // pred_fallthru
          _
        // Predicated region
        $region65: #{tpu_custom_call.1} parent=55 // pred_check
          %p1442 = pneg %p240
        $region66: #{tpu_custom_call.1} parent=55 // pred_check_branch
          %1444 = sbr.rel (%p1442) target = $region68
        $region67: #{tpu_custom_call.1} parent=55 // pred_region
          %s1445 = smul.u32 %s33, 2
          %s1446 = ssub.s32 1, %s1445
          %s1447 = smul.u32 %s32, %s1446
          %s1448 = sadd.s32 %s33, %s1447
          %s1449 = smul.u32 4, %s1448
          %p1450 = scmp.lt.s32.totalorder %s32, 1
          %s1451 = scalar_select %p1450, %s32, 1
          %p1452 = scmp.lt.s32.totalorder %s1449, 7
          %s1453 = scalar_select %p1452, %s1449, 7
          %s1454 = smul.addr %s1451, 8
          %s1455 = sadd.s32 %s1453, %s1454
          %s1456 = smul.addr %s1455, 8
          %s1457 = scalar_lea.vmem %s5, %s1456
        $region68: #{tpu_custom_call.1} parent=55 // pred_fallthru
          _
      $region56: #{tpu_custom_call.1} parent=5 // pred_fallthru
        _
    $region6: #{tpu_custom_call.1} parent=1 // loop_footer
      %s25 = sadd.s32 1, %s21
    $region7: #{tpu_custom_call.1} parent=1 // loop_footer_branch
      %20 = sbr.rel target = $region3
    $region8: #{tpu_custom_call.1} parent=1 // loop_exit
      _
    %1458 = vsyncpa [#allocation5], 1
    %s1459 = scalar_lea.sflag [#allocation5], 1
    %1460 = vsyncpa %s1459, 1
    %1461 = vsyncpa [#allocation6], 1
    %s1462 = scalar_lea.sflag [#allocation6], 1
    %1463 = vsyncpa %s1462, 1
    %1464 = vsyncpa [#allocation9], 1
    %s1465 = scalar_lea.sflag [#allocation9], 1
    %1466 = vsyncpa %s1465, 1

</llo_original>
